<compile_context>
chip_gen: v7x
topology: tpu7x:2x2x1
jax: 0.10.0
libtpu: 0.0.40
codegen_flags: <defaults>
</compile_context>

<pallas_src>
import jax
import jax.numpy as jnp
from jax.experimental import pallas as pl
from jax.experimental.pallas import tpu as pltpu

BN_EPS = 1e-5

# Static, 128-aligned (lo, hi) lane offsets into the coalesced small-param vec.
_G1, _BE1 = (0, 256), (256, 512)
_G2, _BE2 = (512, 640), (640, 768)
_G3, _BE3 = (768, 1024), (1024, 1280)
_G4, _BE4 = (1280, 1792), (1792, 2304)
_BC = (2304, 2432)
_P_TOTAL = 2432


def _bn_train(h, gamma, beta):
    # BatchNorm1d training-mode semantics: batch mean, biased batch variance.
    # Single-pass stats; scale folded on the (1, d) row before broadcasting.
    mean = jnp.mean(h, axis=0, keepdims=True)
    mean_sq = jnp.mean(h * h, axis=0, keepdims=True)
    var = mean_sq - mean * mean
    scale = jax.lax.rsqrt(var + BN_EPS) * gamma
    return (h - mean) * scale + beta


def ce_aware_kernel(x_ref, w1_ref, w2_ref, w3_ref, w4_ref, wc_ref, p_ref,
                    xo_ref, f_ref):
    def sl(lohi):
        lo, hi = lohi
        return p_ref[:, lo:hi]          # static 128-aligned lane slice (free)

    x = x_ref[...].astype(jnp.bfloat16)

    # Linear(512 -> 256) [bias dropped: cancelled by BN] + BN + ReLU
    h = jnp.dot(x, w1_ref[...], preferred_element_type=jnp.float32)
    h = jnp.maximum(_bn_train(h, sl(_G1), sl(_BE1)), 0.0)

    # Linear(256 -> 128) + BN + ReLU
    h = jnp.dot(h.astype(jnp.bfloat16), w2_ref[...],
                preferred_element_type=jnp.float32)
    h = jnp.maximum(_bn_train(h, sl(_G2), sl(_BE2)), 0.0)

    # Linear(128 -> 256) + BN + ReLU
    h = jnp.dot(h.astype(jnp.bfloat16), w3_ref[...],
                preferred_element_type=jnp.float32)
    h = jnp.maximum(_bn_train(h, sl(_G3), sl(_BE3)), 0.0)

    # Linear(256 -> 512, no bias) + BN  -> feature f
    f = jnp.dot(h.astype(jnp.bfloat16), w4_ref[...],
                preferred_element_type=jnp.float32)
    f = _bn_train(f, sl(_G4), sl(_BE4))
    f_ref[...] = f

    # classifier Linear(512 -> 124), padded to 128 lanes for dense stores
    xo_ref[...] = (
        jnp.dot(f.astype(jnp.bfloat16), wc_ref[...],
                preferred_element_type=jnp.float32)
        + sl(_BC)
    )


def pack_params(raw):
    """Kernel-facing params: bf16 weights, lane-padded classifier, coalesced vec."""
    wc_pad = jnp.zeros((512, 128), jnp.float32).at[:, :124].set(raw["wc"])
    bc_pad = jnp.zeros((1, 128), jnp.float32).at[:, :124].set(raw["bc"])
    small = jnp.concatenate(
        [raw["g1"], raw["be1"], raw["g2"], raw["be2"],
         raw["g3"], raw["be3"], raw["g4"], raw["be4"], bc_pad],
        axis=1,
    )
    assert small.shape == (1, _P_TOTAL)
    return {
        "w1": raw["w1"].astype(jnp.bfloat16),
        "w2": raw["w2"].astype(jnp.bfloat16),
        "w3": raw["w3"].astype(jnp.bfloat16),
        "w4": raw["w4"].astype(jnp.bfloat16),
        "wc": wc_pad.astype(jnp.bfloat16),
        "small": small.astype(jnp.float32),
    }


def ce_aware_forward(ce, kp):
    B = ce.shape[0]
    inputs = (ce, kp["w1"], kp["w2"], kp["w3"], kp["w4"], kp["wc"], kp["small"])
    vmem = pl.BlockSpec(memory_space=pltpu.MemorySpace.VMEM)

    flops = 2 * B * (512 * 256 + 256 * 128 + 128 * 256 + 256 * 512 + 512 * 128)
    bytes_accessed = (
        sum(int(a.size) * a.dtype.itemsize for a in inputs)
        + B * 128 * 4 + B * 512 * 4
    )

    xo_pad, f = pl.pallas_call(
        ce_aware_kernel,
        out_shape=(
            jax.ShapeDtypeStruct((B, 128), jnp.float32),   # padded logits
            jax.ShapeDtypeStruct((B, 512), jnp.float32),   # feature f
        ),
        in_specs=[vmem] * len(inputs),
        out_specs=(vmem, vmem),
        cost_estimate=pl.CostEstimate(
            flops=flops, transcendentals=1152, bytes_accessed=bytes_accessed),
    )(*inputs)
    return xo_pad[:, :124], f


def init_raw_params(key):
    # Deterministic synthetic parameters, PyTorch shapes (weights stored (in, out)).
    def lin(k, din, dout, bias=True):
        kw, kb = jax.random.split(k)
        w = jax.random.normal(kw, (din, dout), jnp.float32) * 0.02
        b = (jax.random.normal(kb, (1, dout), jnp.float32) * 0.02) if bias else None
        return w, b

    def bn(k, d):
        kg, kb = jax.random.split(k)
        return (1.0 + 0.1 * jax.random.normal(kg, (1, d), jnp.float32),
                0.1 * jax.random.normal(kb, (1, d), jnp.float32))

    ks = jax.random.split(key, 9)
    p = {}
    p["w1"], p["b1"] = lin(ks[0], 512, 256)
    p["g1"], p["be1"] = bn(ks[1], 256)
    p["w2"], p["b2"] = lin(ks[2], 256, 128)
    p["g2"], p["be2"] = bn(ks[3], 128)
    p["w3"], p["b3"] = lin(ks[4], 128, 256)
    p["g3"], p["be3"] = bn(ks[5], 256)
    p["w4"], _ = lin(ks[6], 256, 512, bias=False)
    p["g4"], p["be4"] = bn(ks[7], 512)
    p["wc"], p["bc"] = lin(ks[8], 512, 124)
    return p


def reference(ce, raw):
    # Pure-JAX reference with full module semantics (biases on layers 1-3,
    # two-pass BN variance) using the same bf16-matmul / f32-accumulate policy
    # as the kernel, so the pre-BN biases cancel and results match tightly.
    def dot_bf16(a, w):
        return jnp.dot(a.astype(jnp.bfloat16), w.astype(jnp.bfloat16),
                       preferred_element_type=jnp.float32)

    def bn(h, g, b):
        m = jnp.mean(h, axis=0, keepdims=True)
        v = jnp.mean((h - m) ** 2, axis=0, keepdims=True)
        return (h - m) * jax.lax.rsqrt(v + BN_EPS) * g + b

    h = jnp.maximum(bn(dot_bf16(ce, raw["w1"]) + raw["b1"], raw["g1"], raw["be1"]), 0.0)
    h = jnp.maximum(bn(dot_bf16(h, raw["w2"]) + raw["b2"], raw["g2"], raw["be2"]), 0.0)
    h = jnp.maximum(bn(dot_bf16(h, raw["w3"]) + raw["b3"], raw["g3"], raw["be3"]), 0.0)
    f = bn(dot_bf16(h, raw["w4"]), raw["g4"], raw["be4"])
    x = dot_bf16(f, raw["wc"]) + raw["bc"]
    return x, f


if __name__ == "__main__":
    key = jax.random.PRNGKey(0)
    k_params, k_x = jax.random.split(key)
    raw_params = init_raw_params(k_params)
    kernel_params = pack_params(raw_params)

    B = 8  # small batch; sublane-aligned (multiple of 8)
    ce = jax.random.normal(k_x, (B, 512), jnp.float32)

    x_out, f_out = ce_aware_forward(ce, kernel_params)
    jax.block_until_ready((x_out, f_out))

    x_ref, f_ref = reference(ce, raw_params)
    assert x_out.shape == (B, 124) and f_out.shape == (B, 512)
    assert jnp.allclose(f_out, f_ref, atol=1e-2, rtol=1e-2)
    assert jnp.allclose(x_out, x_ref, atol=1e-2, rtol=1e-2)

    print("KERNEL_OK")
</pallas_src>

<mosaic_0001>
module attributes {stable_mosaic.version = 11 : i64} {
  func.func @ce_aware_kernel(%arg0: memref<8x512xf32, #tpu.memory_space<vmem>>, %arg1: memref<512x256xbf16, #tpu.memory_space<vmem>>, %arg2: memref<256x128xbf16, #tpu.memory_space<vmem>>, %arg3: memref<128x256xbf16, #tpu.memory_space<vmem>>, %arg4: memref<256x512xbf16, #tpu.memory_space<vmem>>, %arg5: memref<512x128xbf16, #tpu.memory_space<vmem>>, %arg6: memref<1x2432xf32, #tpu.memory_space<vmem>>, %arg7: memref<8x128xf32, #tpu.memory_space<vmem>>, %arg8: memref<8x512xf32, #tpu.memory_space<vmem>>) attributes {dimension_semantics = [], scalar_prefetch = 0 : i64, scratch_operands = 0 : i64, tpu.core_type = #tpu.core_type<tc>} {
    %c0 = arith.constant 0 : index
    %c0_0 = arith.constant 0 : index
    %0 = vector.load %arg0[%c0, %c0_0] : memref<8x512xf32, #tpu.memory_space<vmem>>, vector<8x512xf32>
    %1 = arith.truncf %0 : vector<8x512xf32> to vector<8x512xbf16>
    %c0_1 = arith.constant 0 : index
    %c0_2 = arith.constant 0 : index
    %2 = vector.load %arg1[%c0_1, %c0_2] : memref<512x256xbf16, #tpu.memory_space<vmem>>, vector<512x256xbf16>
    %cst = arith.constant dense<0.000000e+00> : vector<8x256xf32>
    %3 = tpu.matmul %1, %2, %cst {dimension_numbers = #tpu.dot_dimension_numbers<[1], [0], [0], [1], [0, 0, 1, 1], [], []>} : vector<8x512xbf16>, vector<512x256xbf16>, vector<8x256xf32> -> vector<8x256xf32>
    %c0_3 = arith.constant 0 : index
    %c0_4 = arith.constant 0 : index
    %4 = vector.load %arg6[%c0_3, %c0_4] : memref<1x2432xf32, #tpu.memory_space<vmem>>, vector<1x256xf32>
    %c0_5 = arith.constant 0 : index
    %c256 = arith.constant 256 : index
    %5 = vector.load %arg6[%c0_5, %c256] : memref<1x2432xf32, #tpu.memory_space<vmem>>, vector<1x256xf32>
    %cst_6 = arith.constant dense<0.000000e+00> : vector<256xf32>
    %6 = vector.multi_reduction <add>, %3, %cst_6 [0] : vector<8x256xf32> to vector<256xf32>
    %7 = vector.shape_cast %6 : vector<256xf32> to vector<1x256xf32>
    %cst_7 = arith.constant 8.000000e+00 : f32
    %8 = vector.broadcast %cst_7 : f32 to vector<1x256xf32>
    %9 = arith.divf %7, %8 : vector<1x256xf32>
    %10 = arith.mulf %3, %3 : vector<8x256xf32>
    %cst_8 = arith.constant dense<0.000000e+00> : vector<256xf32>
    %11 = vector.multi_reduction <add>, %10, %cst_8 [0] : vector<8x256xf32> to vector<256xf32>
    %12 = vector.shape_cast %11 : vector<256xf32> to vector<1x256xf32>
    %cst_9 = arith.constant 8.000000e+00 : f32
    %13 = vector.broadcast %cst_9 : f32 to vector<1x256xf32>
    %14 = arith.divf %12, %13 : vector<1x256xf32>
    %15 = arith.mulf %9, %9 : vector<1x256xf32>
    %16 = arith.subf %14, %15 : vector<1x256xf32>
    %cst_10 = arith.constant 9.99999974E-6 : f32
    %17 = vector.broadcast %cst_10 : f32 to vector<1x256xf32>
    %18 = arith.addf %16, %17 : vector<1x256xf32>
    %19 = math.rsqrt %18 : vector<1x256xf32>
    %20 = arith.mulf %19, %4 : vector<1x256xf32>
    %21 = vector.broadcast %9 : vector<1x256xf32> to vector<8x256xf32>
    %22 = arith.subf %3, %21 : vector<8x256xf32>
    %23 = vector.broadcast %20 : vector<1x256xf32> to vector<8x256xf32>
    %24 = arith.mulf %22, %23 : vector<8x256xf32>
    %25 = vector.broadcast %5 : vector<1x256xf32> to vector<8x256xf32>
    %26 = arith.addf %24, %25 : vector<8x256xf32>
    %cst_11 = arith.constant 0.000000e+00 : f32
    %27 = vector.broadcast %cst_11 : f32 to vector<8x256xf32>
    %28 = arith.maximumf %26, %27 : vector<8x256xf32>
    %29 = arith.truncf %28 : vector<8x256xf32> to vector<8x256xbf16>
    %c0_12 = arith.constant 0 : index
    %c0_13 = arith.constant 0 : index
    %30 = vector.load %arg2[%c0_12, %c0_13] : memref<256x128xbf16, #tpu.memory_space<vmem>>, vector<256x128xbf16>
    %cst_14 = arith.constant dense<0.000000e+00> : vector<8x128xf32>
    %31 = tpu.matmul %29, %30, %cst_14 {dimension_numbers = #tpu.dot_dimension_numbers<[1], [0], [0], [1], [0, 0, 1, 1], [], []>} : vector<8x256xbf16>, vector<256x128xbf16>, vector<8x128xf32> -> vector<8x128xf32>
    %c0_15 = arith.constant 0 : index
    %c512 = arith.constant 512 : index
    %32 = vector.load %arg6[%c0_15, %c512] : memref<1x2432xf32, #tpu.memory_space<vmem>>, vector<1x128xf32>
    %c0_16 = arith.constant 0 : index
    %c640 = arith.constant 640 : index
    %33 = vector.load %arg6[%c0_16, %c640] : memref<1x2432xf32, #tpu.memory_space<vmem>>, vector<1x128xf32>
    %cst_17 = arith.constant dense<0.000000e+00> : vector<128xf32>
    %34 = vector.multi_reduction <add>, %31, %cst_17 [0] : vector<8x128xf32> to vector<128xf32>
    %35 = vector.shape_cast %34 : vector<128xf32> to vector<1x128xf32>
    %cst_18 = arith.constant 8.000000e+00 : f32
    %36 = vector.broadcast %cst_18 : f32 to vector<1x128xf32>
    %37 = arith.divf %35, %36 : vector<1x128xf32>
    %38 = arith.mulf %31, %31 : vector<8x128xf32>
    %cst_19 = arith.constant dense<0.000000e+00> : vector<128xf32>
    %39 = vector.multi_reduction <add>, %38, %cst_19 [0] : vector<8x128xf32> to vector<128xf32>
    %40 = vector.shape_cast %39 : vector<128xf32> to vector<1x128xf32>
    %cst_20 = arith.constant 8.000000e+00 : f32
    %41 = vector.broadcast %cst_20 : f32 to vector<1x128xf32>
    %42 = arith.divf %40, %41 : vector<1x128xf32>
    %43 = arith.mulf %37, %37 : vector<1x128xf32>
    %44 = arith.subf %42, %43 : vector<1x128xf32>
    %cst_21 = arith.constant 9.99999974E-6 : f32
    %45 = vector.broadcast %cst_21 : f32 to vector<1x128xf32>
    %46 = arith.addf %44, %45 : vector<1x128xf32>
    %47 = math.rsqrt %46 : vector<1x128xf32>
    %48 = arith.mulf %47, %32 : vector<1x128xf32>
    %49 = vector.broadcast %37 : vector<1x128xf32> to vector<8x128xf32>
    %50 = arith.subf %31, %49 : vector<8x128xf32>
    %51 = vector.broadcast %48 : vector<1x128xf32> to vector<8x128xf32>
    %52 = arith.mulf %50, %51 : vector<8x128xf32>
    %53 = vector.broadcast %33 : vector<1x128xf32> to vector<8x128xf32>
    %54 = arith.addf %52, %53 : vector<8x128xf32>
    %cst_22 = arith.constant 0.000000e+00 : f32
    %55 = vector.broadcast %cst_22 : f32 to vector<8x128xf32>
    %56 = arith.maximumf %54, %55 : vector<8x128xf32>
    %57 = arith.truncf %56 : vector<8x128xf32> to vector<8x128xbf16>
    %c0_23 = arith.constant 0 : index
    %c0_24 = arith.constant 0 : index
    %58 = vector.load %arg3[%c0_23, %c0_24] : memref<128x256xbf16, #tpu.memory_space<vmem>>, vector<128x256xbf16>
    %cst_25 = arith.constant dense<0.000000e+00> : vector<8x256xf32>
    %59 = tpu.matmul %57, %58, %cst_25 {dimension_numbers = #tpu.dot_dimension_numbers<[1], [0], [0], [1], [0, 0, 1, 1], [], []>} : vector<8x128xbf16>, vector<128x256xbf16>, vector<8x256xf32> -> vector<8x256xf32>
    %c0_26 = arith.constant 0 : index
    %c768 = arith.constant 768 : index
    %60 = vector.load %arg6[%c0_26, %c768] : memref<1x2432xf32, #tpu.memory_space<vmem>>, vector<1x256xf32>
    %c0_27 = arith.constant 0 : index
    %c1024 = arith.constant 1024 : index
    %61 = vector.load %arg6[%c0_27, %c1024] : memref<1x2432xf32, #tpu.memory_space<vmem>>, vector<1x256xf32>
    %cst_28 = arith.constant dense<0.000000e+00> : vector<256xf32>
    %62 = vector.multi_reduction <add>, %59, %cst_28 [0] : vector<8x256xf32> to vector<256xf32>
    %63 = vector.shape_cast %62 : vector<256xf32> to vector<1x256xf32>
    %cst_29 = arith.constant 8.000000e+00 : f32
    %64 = vector.broadcast %cst_29 : f32 to vector<1x256xf32>
    %65 = arith.divf %63, %64 : vector<1x256xf32>
    %66 = arith.mulf %59, %59 : vector<8x256xf32>
    %cst_30 = arith.constant dense<0.000000e+00> : vector<256xf32>
    %67 = vector.multi_reduction <add>, %66, %cst_30 [0] : vector<8x256xf32> to vector<256xf32>
    %68 = vector.shape_cast %67 : vector<256xf32> to vector<1x256xf32>
    %cst_31 = arith.constant 8.000000e+00 : f32
    %69 = vector.broadcast %cst_31 : f32 to vector<1x256xf32>
    %70 = arith.divf %68, %69 : vector<1x256xf32>
    %71 = arith.mulf %65, %65 : vector<1x256xf32>
    %72 = arith.subf %70, %71 : vector<1x256xf32>
    %cst_32 = arith.constant 9.99999974E-6 : f32
    %73 = vector.broadcast %cst_32 : f32 to vector<1x256xf32>
    %74 = arith.addf %72, %73 : vector<1x256xf32>
    %75 = math.rsqrt %74 : vector<1x256xf32>
    %76 = arith.mulf %75, %60 : vector<1x256xf32>
    %77 = vector.broadcast %65 : vector<1x256xf32> to vector<8x256xf32>
    %78 = arith.subf %59, %77 : vector<8x256xf32>
    %79 = vector.broadcast %76 : vector<1x256xf32> to vector<8x256xf32>
    %80 = arith.mulf %78, %79 : vector<8x256xf32>
    %81 = vector.broadcast %61 : vector<1x256xf32> to vector<8x256xf32>
    %82 = arith.addf %80, %81 : vector<8x256xf32>
    %cst_33 = arith.constant 0.000000e+00 : f32
    %83 = vector.broadcast %cst_33 : f32 to vector<8x256xf32>
    %84 = arith.maximumf %82, %83 : vector<8x256xf32>
    %85 = arith.truncf %84 : vector<8x256xf32> to vector<8x256xbf16>
    %c0_34 = arith.constant 0 : index
    %c0_35 = arith.constant 0 : index
    %86 = vector.load %arg4[%c0_34, %c0_35] : memref<256x512xbf16, #tpu.memory_space<vmem>>, vector<256x512xbf16>
    %cst_36 = arith.constant dense<0.000000e+00> : vector<8x512xf32>
    %87 = tpu.matmul %85, %86, %cst_36 {dimension_numbers = #tpu.dot_dimension_numbers<[1], [0], [0], [1], [0, 0, 1, 1], [], []>} : vector<8x256xbf16>, vector<256x512xbf16>, vector<8x512xf32> -> vector<8x512xf32>
    %c0_37 = arith.constant 0 : index
    %c1280 = arith.constant 1280 : index
    %88 = vector.load %arg6[%c0_37, %c1280] : memref<1x2432xf32, #tpu.memory_space<vmem>>, vector<1x512xf32>
    %c0_38 = arith.constant 0 : index
    %c1792 = arith.constant 1792 : index
    %89 = vector.load %arg6[%c0_38, %c1792] : memref<1x2432xf32, #tpu.memory_space<vmem>>, vector<1x512xf32>
    %cst_39 = arith.constant dense<0.000000e+00> : vector<512xf32>
    %90 = vector.multi_reduction <add>, %87, %cst_39 [0] : vector<8x512xf32> to vector<512xf32>
    %91 = vector.shape_cast %90 : vector<512xf32> to vector<1x512xf32>
    %cst_40 = arith.constant 8.000000e+00 : f32
    %92 = vector.broadcast %cst_40 : f32 to vector<1x512xf32>
    %93 = arith.divf %91, %92 : vector<1x512xf32>
    %94 = arith.mulf %87, %87 : vector<8x512xf32>
    %cst_41 = arith.constant dense<0.000000e+00> : vector<512xf32>
    %95 = vector.multi_reduction <add>, %94, %cst_41 [0] : vector<8x512xf32> to vector<512xf32>
    %96 = vector.shape_cast %95 : vector<512xf32> to vector<1x512xf32>
    %cst_42 = arith.constant 8.000000e+00 : f32
    %97 = vector.broadcast %cst_42 : f32 to vector<1x512xf32>
    %98 = arith.divf %96, %97 : vector<1x512xf32>
    %99 = arith.mulf %93, %93 : vector<1x512xf32>
    %100 = arith.subf %98, %99 : vector<1x512xf32>
    %cst_43 = arith.constant 9.99999974E-6 : f32
    %101 = vector.broadcast %cst_43 : f32 to vector<1x512xf32>
    %102 = arith.addf %100, %101 : vector<1x512xf32>
    %103 = math.rsqrt %102 : vector<1x512xf32>
    %104 = arith.mulf %103, %88 : vector<1x512xf32>
    %105 = vector.broadcast %93 : vector<1x512xf32> to vector<8x512xf32>
    %106 = arith.subf %87, %105 : vector<8x512xf32>
    %107 = vector.broadcast %104 : vector<1x512xf32> to vector<8x512xf32>
    %108 = arith.mulf %106, %107 : vector<8x512xf32>
    %109 = vector.broadcast %89 : vector<1x512xf32> to vector<8x512xf32>
    %110 = arith.addf %108, %109 : vector<8x512xf32>
    %c0_44 = arith.constant 0 : index
    %c0_45 = arith.constant 0 : index
    %111 = vector.load %arg8[%c0_44, %c0_45] : memref<8x512xf32, #tpu.memory_space<vmem>>, vector<8x512xf32>
    tpu.vector_store %arg8[%c0_44, %c0_45], %110 {strides = array<i32>} : memref<8x512xf32, #tpu.memory_space<vmem>>, vector<8x512xf32>,
    %112 = arith.truncf %110 : vector<8x512xf32> to vector<8x512xbf16>
    %c0_46 = arith.constant 0 : index
    %c0_47 = arith.constant 0 : index
    %113 = vector.load %arg5[%c0_46, %c0_47] : memref<512x128xbf16, #tpu.memory_space<vmem>>, vector<512x128xbf16>
    %cst_48 = arith.constant dense<0.000000e+00> : vector<8x128xf32>
    %114 = tpu.matmul %112, %113, %cst_48 {dimension_numbers = #tpu.dot_dimension_numbers<[1], [0], [0], [1], [0, 0, 1, 1], [], []>} : vector<8x512xbf16>, vector<512x128xbf16>, vector<8x128xf32> -> vector<8x128xf32>
    %c0_49 = arith.constant 0 : index
    %c2304 = arith.constant 2304 : index
    %115 = vector.load %arg6[%c0_49, %c2304] : memref<1x2432xf32, #tpu.memory_space<vmem>>, vector<1x128xf32>
    %116 = vector.broadcast %115 : vector<1x128xf32> to vector<8x128xf32>
    %117 = arith.addf %114, %116 : vector<8x128xf32>
    %c0_50 = arith.constant 0 : index
    %c0_51 = arith.constant 0 : index
    %118 = vector.load %arg7[%c0_50, %c0_51] : memref<8x128xf32, #tpu.memory_space<vmem>>, vector<8x128xf32>
    tpu.vector_store %arg7[%c0_50, %c0_51], %117 {strides = array<i32>} : memref<8x128xf32, #tpu.memory_space<vmem>>, vector<8x128xf32>,
    return
  }
}

</mosaic_0001>

<llo_original>
// kernel: tpu_custom_call.1
$region0: #{tpu_custom_call.1}
  #allocation0 [shape = 'u32[]', space=smem, size = 0x4, offset = 0x4, fixed_abs, tag = 'smem constant byte address 0x4 - core index']
  #allocation1 [shape = 'u32[144,128]{1,0:T(1,128)}', space=vmem, size = 0x12000, scoped, tag = 'internal scratch']
  %s0 = inlined_call_operand.hbm [shape: f32[8,512], index: 0, kind: input, shape index: {}]
  %s1 = inlined_call_operand.hbm [shape: bf16[512,256], index: 1, kind: input, shape index: {}]
  %s2 = inlined_call_operand.hbm [shape: bf16[256,128], index: 2, kind: input, shape index: {}]
  %s3 = inlined_call_operand.hbm [shape: bf16[128,256], index: 3, kind: input, shape index: {}]
  %s4 = inlined_call_operand.hbm [shape: bf16[256,512], index: 4, kind: input, shape index: {}]
  %s5 = inlined_call_operand.hbm [shape: bf16[512,128], index: 5, kind: input, shape index: {}]
  %s6 = inlined_call_operand.vmem [shape: f32[1,2432], index: 6, kind: input, shape index: {}]
  %s7 = inlined_call_operand.hbm [shape: f32[8,128], index: 7, kind: output, shape index: {0}]
  %s8 = inlined_call_operand.hbm [shape: f32[8,512], index: 8, kind: output, shape index: {1}]
  %9 = xla_tuple %s7, %s8
  %s10 = sld [smem:[#allocation0]]
  $region70: #{tpu_custom_call.1} parent=0
    _
  %s12 = ssub.s32 1, %s10
  %s13 = scalar_select 0, %s12, %s10
  $region1: #{tpu_custom_call.1} parent=0
    #allocation2 [shape = 'u8[16384]{0}', space=vmem, size = 0x4000, scoped, tag = 'input window, operand 0, single buffered']
    #allocation3 [shape = 's32[1]{0}', space=sflag, size = 0x4, scoped, tag = 'scoped memory for tpu_custom_call.1']
    #allocation4 [shape = 's32[1]{0}', space=sflag, size = 0x4, scoped, tag = 'scoped memory for tpu_custom_call.1']
    #allocation5 [shape = 'u8[262144]{0}', space=vmem, size = 0x40000, scoped, tag = 'input window, operand 1, single buffered']
    #allocation6 [shape = 's32[1]{0}', space=sflag, size = 0x4, scoped, tag = 'scoped memory for tpu_custom_call.1']
    #allocation7 [shape = 'u8[65536]{0}', space=vmem, size = 0x10000, scoped, tag = 'input window, operand 2, single buffered']
    #allocation8 [shape = 'u8[65536]{0}', space=vmem, size = 0x10000, scoped, tag = 'input window, operand 3, single buffered']
    #allocation9 [shape = 's32[1]{0}', space=sflag, size = 0x4, scoped, tag = 'scoped memory for tpu_custom_call.1']
    #allocation10 [shape = 'u8[262144]{0}', space=vmem, size = 0x40000, scoped, tag = 'input window, operand 4, single buffered']
    #allocation11 [shape = 'u8[131072]{0}', space=vmem, size = 0x20000, scoped, tag = 'input window, operand 5, single buffered']
    #allocation12 [shape = 's32[1]{0}', space=sflag, size = 0x4, scoped, tag = 'scoped memory for tpu_custom_call.1']
    #allocation13 [shape = 'u8[4096]{0}', space=vmem, size = 0x1000, scoped, tag = 'output window, operand 0, single buffered']
    #allocation14 [shape = 'u8[16384]{0}', space=vmem, size = 0x4000, scoped, tag = 'output window, operand 1, single buffered']
    #allocation15 [shape = 's32[1]{0}', space=sflag, size = 0x4, scoped, tag = 'scoped memory for tpu_custom_call.1']
    %14 = vsyncpa [#allocation3], 0
    %15 = vsyncpa [#allocation6], 0
    %16 = vsyncpa [#allocation9], 0
    %17 = vsyncpa [#allocation12], 0
    %18 = vsyncpa [#allocation4], 0
    %19 = vsyncpa [#allocation15], 0
    // Predicated region
    $region2: #{tpu_custom_call.1} parent=1 // pred_check
      _
    $region3: #{tpu_custom_call.1} parent=1 // pred_check_branch
      %21 = sbr.rel (0) target = $region5
    $region4: #{tpu_custom_call.1} parent=1 // pred_region
      %s23 = ssub.s32 512, 512
      %24 = vsyncadd [#allocation3], %s23
      %s26 = sshll.u32 [#allocation2], 4
      %s27 = int_to_ptr.vmem [resolvable:$true] %s26
      %29 = dma.hbm_to_vmem [thread:$0]  %s0, 512, %s27, [#allocation3]
    $region5: #{tpu_custom_call.1} parent=1 // pred_fallthru
      _
    // Predicated region
    $region6: #{tpu_custom_call.1} parent=1 // pred_check
      _
    $region7: #{tpu_custom_call.1} parent=1 // pred_check_branch
      %31 = sbr.rel (0) target = $region9
    $region8: #{tpu_custom_call.1} parent=1 // pred_region
      %s33 = ssub.s32 8192, 8192
      %34 = vsyncadd [#allocation6], %s33
      %s35 = sshll.u32 [#allocation5], 4
      %s36 = int_to_ptr.vmem [resolvable:$true] %s35
      %41 = dma.hbm_to_vmem [thread:$0]  %s1, 8192, %s36, [#allocation6], 128, 128, 8
    $region9: #{tpu_custom_call.1} parent=1 // pred_fallthru
      _
    // Predicated region
    $region10: #{tpu_custom_call.1} parent=1 // pred_check
      _
    $region11: #{tpu_custom_call.1} parent=1 // pred_check_branch
      %43 = sbr.rel (0) target = $region13
    $region12: #{tpu_custom_call.1} parent=1 // pred_region
      %s45 = ssub.s32 2048, 2048
      %46 = vsyncadd [#allocation6], %s45
      %s47 = sshll.u32 [#allocation7], 4
      %s48 = int_to_ptr.vmem [resolvable:$true] %s47
      %53 = dma.hbm_to_vmem [thread:$0]  %s2, 2048, %s48, [#allocation6], 64, 64, 4
    $region13: #{tpu_custom_call.1} parent=1 // pred_fallthru
      _
    // Predicated region
    $region14: #{tpu_custom_call.1} parent=1 // pred_check
      _
    $region15: #{tpu_custom_call.1} parent=1 // pred_check_branch
      %55 = sbr.rel (0) target = $region17
    $region16: #{tpu_custom_call.1} parent=1 // pred_region
      %s57 = ssub.s32 2048, 2048
      %58 = vsyncadd [#allocation9], %s57
      %s59 = sshll.u32 [#allocation8], 4
      %s60 = int_to_ptr.vmem [resolvable:$true] %s59
      %65 = dma.hbm_to_vmem [thread:$0]  %s3, 2048, %s60, [#allocation9], 128, 128, 8
    $region17: #{tpu_custom_call.1} parent=1 // pred_fallthru
      _
    // Predicated region
    $region18: #{tpu_custom_call.1} parent=1 // pred_check
      _
    $region19: #{tpu_custom_call.1} parent=1 // pred_check_branch
      %67 = sbr.rel (0) target = $region21
    $region20: #{tpu_custom_call.1} parent=1 // pred_region
      %s69 = ssub.s32 8192, 8192
      %70 = vsyncadd [#allocation9], %s69
      %s71 = sshll.u32 [#allocation10], 4
      %s72 = int_to_ptr.vmem [resolvable:$true] %s71
      %77 = dma.hbm_to_vmem [thread:$0]  %s4, 8192, %s72, [#allocation9], 256, 256, 16
    $region21: #{tpu_custom_call.1} parent=1 // pred_fallthru
      _
    // Predicated region
    $region22: #{tpu_custom_call.1} parent=1 // pred_check
      _
    $region23: #{tpu_custom_call.1} parent=1 // pred_check_branch
      %79 = sbr.rel (0) target = $region25
    $region24: #{tpu_custom_call.1} parent=1 // pred_region
      %s81 = ssub.s32 4096, 4096
      %82 = vsyncadd [#allocation12], %s81
      %s83 = sshll.u32 [#allocation11], 4
      %s84 = int_to_ptr.vmem [resolvable:$true] %s83
      %89 = dma.hbm_to_vmem [thread:$0]  %s5, 4096, %s84, [#allocation12], 64, 64, 4
    $region25: #{tpu_custom_call.1} parent=1 // pred_fallthru
      _
    // Predicated region
    $region26: #{tpu_custom_call.1} parent=1 // pred_check
      _
    $region27: #{tpu_custom_call.1} parent=1 // pred_check_branch
      %91 = sbr.rel (0) target = $region29
    $region28: #{tpu_custom_call.1} parent=1 // pred_region
      _
    $region29: #{tpu_custom_call.1} parent=1 // pred_fallthru
      _
    // Predicated region
    $region30: #{tpu_custom_call.1} parent=1 // pred_check
      _
    $region31: #{tpu_custom_call.1} parent=1 // pred_check_branch
      %93 = sbr.rel (0) target = $region33
    $region32: #{tpu_custom_call.1} parent=1 // pred_region
      %94 = dma.done [#allocation3], 512
    $region33: #{tpu_custom_call.1} parent=1 // pred_fallthru
      _
    // Predicated region
    $region34: #{tpu_custom_call.1} parent=1 // pred_check
      _
    $region35: #{tpu_custom_call.1} parent=1 // pred_check_branch
      %96 = sbr.rel (0) target = $region37
    $region36: #{tpu_custom_call.1} parent=1 // pred_region
      %97 = dma.done [#allocation6], 8192
    $region37: #{tpu_custom_call.1} parent=1 // pred_fallthru
      _
    // Predicated region
    $region38: #{tpu_custom_call.1} parent=1 // pred_check
      _
    $region39: #{tpu_custom_call.1} parent=1 // pred_check_branch
      %99 = sbr.rel (0) target = $region41
    $region40: #{tpu_custom_call.1} parent=1 // pred_region
      %100 = dma.done [#allocation6], 2048
    $region41: #{tpu_custom_call.1} parent=1 // pred_fallthru
      _
    // Predicated region
    $region42: #{tpu_custom_call.1} parent=1 // pred_check
      _
    $region43: #{tpu_custom_call.1} parent=1 // pred_check_branch
      %102 = sbr.rel (0) target = $region45
    $region44: #{tpu_custom_call.1} parent=1 // pred_region
      %103 = dma.done [#allocation9], 2048
    $region45: #{tpu_custom_call.1} parent=1 // pred_fallthru
      _
    // Predicated region
    $region46: #{tpu_custom_call.1} parent=1 // pred_check
      _
    $region47: #{tpu_custom_call.1} parent=1 // pred_check_branch
      %105 = sbr.rel (0) target = $region49
    $region48: #{tpu_custom_call.1} parent=1 // pred_region
      %106 = dma.done [#allocation9], 8192
    $region49: #{tpu_custom_call.1} parent=1 // pred_fallthru
      _
    // Predicated region
    $region50: #{tpu_custom_call.1} parent=1 // pred_check
      _
    $region51: #{tpu_custom_call.1} parent=1 // pred_check_branch
      %108 = sbr.rel (0) target = $region53
    $region52: #{tpu_custom_call.1} parent=1 // pred_region
      %109 = dma.done [#allocation12], 4096
    $region53: #{tpu_custom_call.1} parent=1 // pred_fallthru
      _
    %v111 = vld [vmem:[#allocation2] sm:$0xff]
    %v112 = vld [vmem:[#allocation2 + $0x8] sm:$0xff]
    %v113 = vld [vmem:[#allocation2 + $0x10] sm:$0xff]
    %v114 = vld [vmem:[#allocation2 + $0x18] sm:$0xff]
    %v115 = vpack.c.bf16 %v111, %v111
    %v116 = vpack.c.bf16 %v112, %v112
    %v117 = vpack.c.bf16 %v113, %v113
    %v118 = vpack.c.bf16 %v114, %v114
    %v119 = vld [vmem:[#allocation5] sm:$0xff]
    %v120 = vld [vmem:[#allocation5 + $0x8] sm:$0xff]
    %v121 = vld [vmem:[#allocation5 + $0x10] sm:$0xff]
    %v122 = vld [vmem:[#allocation5 + $0x18] sm:$0xff]
    %v123 = vld [vmem:[#allocation5 + $0x20] sm:$0xff]
    %v124 = vld [vmem:[#allocation5 + $0x28] sm:$0xff]
    %v125 = vld [vmem:[#allocation5 + $0x30] sm:$0xff]
    %v126 = vld [vmem:[#allocation5 + $0x38] sm:$0xff]
    %v127 = vld [vmem:[#allocation5 + $0x40] sm:$0xff]
    %v128 = vld [vmem:[#allocation5 + $0x48] sm:$0xff]
    %v129 = vld [vmem:[#allocation5 + $0x50] sm:$0xff]
    %v130 = vld [vmem:[#allocation5 + $0x58] sm:$0xff]
    %v131 = vld [vmem:[#allocation5 + $0x60] sm:$0xff]
    %v132 = vld [vmem:[#allocation5 + $0x68] sm:$0xff]
    %v133 = vld [vmem:[#allocation5 + $0x70] sm:$0xff]
    %v134 = vld [vmem:[#allocation5 + $0x78] sm:$0xff]
    %v135 = vld [vmem:[#allocation5 + $0x80] sm:$0xff]
    %v136 = vld [vmem:[#allocation5 + $0x88] sm:$0xff]
    %v137 = vld [vmem:[#allocation5 + $0x90] sm:$0xff]
    %v138 = vld [vmem:[#allocation5 + $0x98] sm:$0xff]
    %v139 = vld [vmem:[#allocation5 + $0xa0] sm:$0xff]
    %v140 = vld [vmem:[#allocation5 + $0xa8] sm:$0xff]
    %v141 = vld [vmem:[#allocation5 + $0xb0] sm:$0xff]
    %v142 = vld [vmem:[#allocation5 + $0xb8] sm:$0xff]
    %v143 = vld [vmem:[#allocation5 + $0xc0] sm:$0xff]
    %v144 = vld [vmem:[#allocation5 + $0xc8] sm:$0xff]
    %v145 = vld [vmem:[#allocation5 + $0xd0] sm:$0xff]
    %v146 = vld [vmem:[#allocation5 + $0xd8] sm:$0xff]
    %v147 = vld [vmem:[#allocation5 + $0xe0] sm:$0xff]
    %v148 = vld [vmem:[#allocation5 + $0xe8] sm:$0xff]
    %v149 = vld [vmem:[#allocation5 + $0xf0] sm:$0xff]
    %v150 = vld [vmem:[#allocation5 + $0xf8] sm:$0xff]
    %v151 = vld [vmem:[#allocation5 + $0x100] sm:$0xff]
    %v152 = vld [vmem:[#allocation5 + $0x108] sm:$0xff]
    %v153 = vld [vmem:[#allocation5 + $0x110] sm:$0xff]
    %v154 = vld [vmem:[#allocation5 + $0x118] sm:$0xff]
    %v155 = vld [vmem:[#allocation5 + $0x120] sm:$0xff]
    %v156 = vld [vmem:[#allocation5 + $0x128] sm:$0xff]
    %v157 = vld [vmem:[#allocation5 + $0x130] sm:$0xff]
    %v158 = vld [vmem:[#allocation5 + $0x138] sm:$0xff]
    %v159 = vld [vmem:[#allocation5 + $0x140] sm:$0xff]
    %v160 = vld [vmem:[#allocation5 + $0x148] sm:$0xff]
    %v161 = vld [vmem:[#allocation5 + $0x150] sm:$0xff]
    %v162 = vld [vmem:[#allocation5 + $0x158] sm:$0xff]
    %v163 = vld [vmem:[#allocation5 + $0x160] sm:$0xff]
    %v164 = vld [vmem:[#allocation5 + $0x168] sm:$0xff]
    %v165 = vld [vmem:[#allocation5 + $0x170] sm:$0xff]
    %v166 = vld [vmem:[#allocation5 + $0x178] sm:$0xff]
    %v167 = vld [vmem:[#allocation5 + $0x180] sm:$0xff]
    %v168 = vld [vmem:[#allocation5 + $0x188] sm:$0xff]
    %v169 = vld [vmem:[#allocation5 + $0x190] sm:$0xff]
    %v170 = vld [vmem:[#allocation5 + $0x198] sm:$0xff]
    %v171 = vld [vmem:[#allocation5 + $0x1a0] sm:$0xff]
    %v172 = vld [vmem:[#allocation5 + $0x1a8] sm:$0xff]
    %v173 = vld [vmem:[#allocation5 + $0x1b0] sm:$0xff]
    %v174 = vld [vmem:[#allocation5 + $0x1b8] sm:$0xff]
    %v175 = vld [vmem:[#allocation5 + $0x1c0] sm:$0xff]
    %v176 = vld [vmem:[#allocation5 + $0x1c8] sm:$0xff]
    %v177 = vld [vmem:[#allocation5 + $0x1d0] sm:$0xff]
    %v178 = vld [vmem:[#allocation5 + $0x1d8] sm:$0xff]
    %v179 = vld [vmem:[#allocation5 + $0x1e0] sm:$0xff]
    %v180 = vld [vmem:[#allocation5 + $0x1e8] sm:$0xff]
    %v181 = vld [vmem:[#allocation5 + $0x1f0] sm:$0xff]
    %v182 = vld [vmem:[#allocation5 + $0x1f8] sm:$0xff]
    %v247 = vunpack.c.l.b16 %v119
    %v248 = vunpack.c.h.b16 %v119
    %v249 = vunpack.c.l.b16 %v120
    %v250 = vunpack.c.h.b16 %v120
    %v251 = vunpack.c.l.b16 %v121
    %v252 = vunpack.c.h.b16 %v121
    %v253 = vunpack.c.l.b16 %v122
    %v254 = vunpack.c.h.b16 %v122
    %v255 = vunpack.c.l.b16 %v123
    %v256 = vunpack.c.h.b16 %v123
    %v257 = vunpack.c.l.b16 %v124
    %v258 = vunpack.c.h.b16 %v124
    %v259 = vunpack.c.l.b16 %v125
    %v260 = vunpack.c.h.b16 %v125
    %v261 = vunpack.c.l.b16 %v126
    %v262 = vunpack.c.h.b16 %v126
    %v263 = vunpack.c.l.b16 %v127
    %v264 = vunpack.c.h.b16 %v127
    %v265 = vunpack.c.l.b16 %v128
    %v266 = vunpack.c.h.b16 %v128
    %v267 = vunpack.c.l.b16 %v129
    %v268 = vunpack.c.h.b16 %v129
    %v269 = vunpack.c.l.b16 %v130
    %v270 = vunpack.c.h.b16 %v130
    %v271 = vunpack.c.l.b16 %v131
    %v272 = vunpack.c.h.b16 %v131
    %v273 = vunpack.c.l.b16 %v132
    %v274 = vunpack.c.h.b16 %v132
    %v275 = vunpack.c.l.b16 %v133
    %v276 = vunpack.c.h.b16 %v133
    %v277 = vunpack.c.l.b16 %v134
    %v278 = vunpack.c.h.b16 %v134
    %v279 = vunpack.c.l.b16 %v135
    %v280 = vunpack.c.h.b16 %v135
    %v281 = vunpack.c.l.b16 %v136
    %v282 = vunpack.c.h.b16 %v136
    %v283 = vunpack.c.l.b16 %v137
    %v284 = vunpack.c.h.b16 %v137
    %v285 = vunpack.c.l.b16 %v138
    %v286 = vunpack.c.h.b16 %v138
    %v287 = vunpack.c.l.b16 %v139
    %v288 = vunpack.c.h.b16 %v139
    %v289 = vunpack.c.l.b16 %v140
    %v290 = vunpack.c.h.b16 %v140
    %v291 = vunpack.c.l.b16 %v141
    %v292 = vunpack.c.h.b16 %v141
    %v293 = vunpack.c.l.b16 %v142
    %v294 = vunpack.c.h.b16 %v142
    %v295 = vunpack.c.l.b16 %v143
    %v296 = vunpack.c.h.b16 %v143
    %v297 = vunpack.c.l.b16 %v144
    %v298 = vunpack.c.h.b16 %v144
    %v299 = vunpack.c.l.b16 %v145
    %v300 = vunpack.c.h.b16 %v145
    %v301 = vunpack.c.l.b16 %v146
    %v302 = vunpack.c.h.b16 %v146
    %v303 = vunpack.c.l.b16 %v147
    %v304 = vunpack.c.h.b16 %v147
    %v305 = vunpack.c.l.b16 %v148
    %v306 = vunpack.c.h.b16 %v148
    %v307 = vunpack.c.l.b16 %v149
    %v308 = vunpack.c.h.b16 %v149
    %v309 = vunpack.c.l.b16 %v150
    %v310 = vunpack.c.h.b16 %v150
    %v311 = vunpack.c.l.b16 %v151
    %v312 = vunpack.c.h.b16 %v151
    %v313 = vunpack.c.l.b16 %v152
    %v314 = vunpack.c.h.b16 %v152
    %v315 = vunpack.c.l.b16 %v153
    %v316 = vunpack.c.h.b16 %v153
    %v317 = vunpack.c.l.b16 %v154
    %v318 = vunpack.c.h.b16 %v154
    %v319 = vunpack.c.l.b16 %v155
    %v320 = vunpack.c.h.b16 %v155
    %v321 = vunpack.c.l.b16 %v156
    %v322 = vunpack.c.h.b16 %v156
    %v323 = vunpack.c.l.b16 %v157
    %v324 = vunpack.c.h.b16 %v157
    %v325 = vunpack.c.l.b16 %v158
    %v326 = vunpack.c.h.b16 %v158
    %v327 = vunpack.c.l.b16 %v159
    %v328 = vunpack.c.h.b16 %v159
    %v329 = vunpack.c.l.b16 %v160
    %v330 = vunpack.c.h.b16 %v160
    %v331 = vunpack.c.l.b16 %v161
    %v332 = vunpack.c.h.b16 %v161
    %v333 = vunpack.c.l.b16 %v162
    %v334 = vunpack.c.h.b16 %v162
    %v335 = vunpack.c.l.b16 %v163
    %v336 = vunpack.c.h.b16 %v163
    %v337 = vunpack.c.l.b16 %v164
    %v338 = vunpack.c.h.b16 %v164
    %v339 = vunpack.c.l.b16 %v165
    %v340 = vunpack.c.h.b16 %v165
    %v341 = vunpack.c.l.b16 %v166
    %v342 = vunpack.c.h.b16 %v166
    %v343 = vunpack.c.l.b16 %v167
    %v344 = vunpack.c.h.b16 %v167
    %v345 = vunpack.c.l.b16 %v168
    %v346 = vunpack.c.h.b16 %v168
    %v347 = vunpack.c.l.b16 %v169
    %v348 = vunpack.c.h.b16 %v169
    %v349 = vunpack.c.l.b16 %v170
    %v350 = vunpack.c.h.b16 %v170
    %v351 = vunpack.c.l.b16 %v171
    %v352 = vunpack.c.h.b16 %v171
    %v353 = vunpack.c.l.b16 %v172
    %v354 = vunpack.c.h.b16 %v172
    %v355 = vunpack.c.l.b16 %v173
    %v356 = vunpack.c.h.b16 %v173
    %v357 = vunpack.c.l.b16 %v174
    %v358 = vunpack.c.h.b16 %v174
    %v359 = vunpack.c.l.b16 %v175
    %v360 = vunpack.c.h.b16 %v175
    %v361 = vunpack.c.l.b16 %v176
    %v362 = vunpack.c.h.b16 %v176
    %v363 = vunpack.c.l.b16 %v177
    %v364 = vunpack.c.h.b16 %v177
    %v365 = vunpack.c.l.b16 %v178
    %v366 = vunpack.c.h.b16 %v178
    %v367 = vunpack.c.l.b16 %v179
    %v368 = vunpack.c.h.b16 %v179
    %v369 = vunpack.c.l.b16 %v180
    %v370 = vunpack.c.h.b16 %v180
    %v371 = vunpack.c.l.b16 %v181
    %v372 = vunpack.c.h.b16 %v181
    %v373 = vunpack.c.l.b16 %v182
    %v374 = vunpack.c.h.b16 %v182
    %v375 = vpack.c.b16 %v249, %v247
    %v376 = vpack.c.b16 %v250, %v248
    %v377 = vpack.c.b16 %v253, %v251
    %v378 = vpack.c.b16 %v254, %v252
    %v379 = vpack.c.b16 %v257, %v255
    %v380 = vpack.c.b16 %v258, %v256
    %v381 = vpack.c.b16 %v261, %v259
    %v382 = vpack.c.b16 %v262, %v260
    %v383 = vpack.c.b16 %v265, %v263
    %v384 = vpack.c.b16 %v266, %v264
    %v385 = vpack.c.b16 %v269, %v267
    %v386 = vpack.c.b16 %v270, %v268
    %v387 = vpack.c.b16 %v273, %v271
    %v388 = vpack.c.b16 %v274, %v272
    %v389 = vpack.c.b16 %v277, %v275
    %v390 = vpack.c.b16 %v278, %v276
    %v391 = vpack.c.b16 %v281, %v279
    %v392 = vpack.c.b16 %v282, %v280
    %v393 = vpack.c.b16 %v285, %v283
    %v394 = vpack.c.b16 %v286, %v284
    %v395 = vpack.c.b16 %v289, %v287
    %v396 = vpack.c.b16 %v290, %v288
    %v397 = vpack.c.b16 %v293, %v291
    %v398 = vpack.c.b16 %v294, %v292
    %v399 = vpack.c.b16 %v297, %v295
    %v400 = vpack.c.b16 %v298, %v296
    %v401 = vpack.c.b16 %v301, %v299
    %v402 = vpack.c.b16 %v302, %v300
    %v403 = vpack.c.b16 %v305, %v303
    %v404 = vpack.c.b16 %v306, %v304
    %v405 = vpack.c.b16 %v309, %v307
    %v406 = vpack.c.b16 %v310, %v308
    %v407 = vpack.c.b16 %v313, %v311
    %v408 = vpack.c.b16 %v314, %v312
    %v409 = vpack.c.b16 %v317, %v315
    %v410 = vpack.c.b16 %v318, %v316
    %v411 = vpack.c.b16 %v321, %v319
    %v412 = vpack.c.b16 %v322, %v320
    %v413 = vpack.c.b16 %v325, %v323
    %v414 = vpack.c.b16 %v326, %v324
    %v415 = vpack.c.b16 %v329, %v327
    %v416 = vpack.c.b16 %v330, %v328
    %v417 = vpack.c.b16 %v333, %v331
    %v418 = vpack.c.b16 %v334, %v332
    %v419 = vpack.c.b16 %v337, %v335
    %v420 = vpack.c.b16 %v338, %v336
    %v421 = vpack.c.b16 %v341, %v339
    %v422 = vpack.c.b16 %v342, %v340
    %v423 = vpack.c.b16 %v345, %v343
    %v424 = vpack.c.b16 %v346, %v344
    %v425 = vpack.c.b16 %v349, %v347
    %v426 = vpack.c.b16 %v350, %v348
    %v427 = vpack.c.b16 %v353, %v351
    %v428 = vpack.c.b16 %v354, %v352
    %v429 = vpack.c.b16 %v357, %v355
    %v430 = vpack.c.b16 %v358, %v356
    %v431 = vpack.c.b16 %v361, %v359
    %v432 = vpack.c.b16 %v362, %v360
    %v433 = vpack.c.b16 %v365, %v363
    %v434 = vpack.c.b16 %v366, %v364
    %v435 = vpack.c.b16 %v369, %v367
    %v436 = vpack.c.b16 %v370, %v368
    %v437 = vpack.c.b16 %v373, %v371
    %v438 = vpack.c.b16 %v374, %v372
    %503 = vmatprep.subr.bf16.mxu0 %v376
    %504 = vmatpush1.bf16.msra.mxu0 %v375
    %505 = vmatprep.subr.bf16.mxu0 %v378
    %506 = vmatpush1.bf16.msra.mxu0 %v377
    %507 = vmatprep.subr.bf16.mxu0 %v380
    %508 = vmatpush1.bf16.msra.mxu0 %v379
    %509 = vmatprep.subr.bf16.mxu0 %v382
    %510 = vmatpush1.bf16.msra.mxu0 %v381
    %511 = vmatprep.subr.bf16.mxu0 %v384
    %512 = vmatpush1.bf16.msra.mxu0 %v383
    %513 = vmatprep.subr.bf16.mxu0 %v386
    %514 = vmatpush1.bf16.msra.mxu0 %v385
    %515 = vmatprep.subr.bf16.mxu0 %v388
    %516 = vmatpush1.bf16.msra.mxu0 %v387
    %517 = vmatprep.subr.bf16.mxu0 %v390
    %518 = vmatpush1.bf16.msra.mxu0 %v389
    %519 = vmatprep.subr.bf16.mxu0 %v392
    %520 = vmatpush1.bf16.msra.mxu0 %v391
    %521 = vmatprep.subr.bf16.mxu0 %v394
    %522 = vmatpush1.bf16.msra.mxu0 %v393
    %523 = vmatprep.subr.bf16.mxu0 %v396
    %524 = vmatpush1.bf16.msra.mxu0 %v395
    %525 = vmatprep.subr.bf16.mxu0 %v398
    %526 = vmatpush1.bf16.msra.mxu0 %v397
    %527 = vmatprep.subr.bf16.mxu0 %v400
    %528 = vmatpush1.bf16.msra.mxu0 %v399
    %529 = vmatprep.subr.bf16.mxu0 %v402
    %530 = vmatpush1.bf16.msra.mxu0 %v401
    %531 = vmatprep.subr.bf16.mxu0 %v404
    %532 = vmatpush1.bf16.msra.mxu0 %v403
    %533 = vmatprep.subr.bf16.mxu0 %v406
    %534 = vmatpush1.bf16.msra.mxu0 %v405
    %535 = vmatprep.mubr.bf16.mxu0 %v116
    %536 = vmatmul.mubr.bf16.gmra.mrb[0].mxu0 %v115
    %v537 = vpop.f32.mrb[0].mxu0
    %v538 = vadd.f32 0.0, %v537
    %v539 = vpop.f32.mrb[0].mxu0
    %v540 = vadd.f32 0.0, %v539
    %v541 = vpop.f32.mrb[0].mxu0
    %v542 = vpop.f32.mrb[0].mxu0
    %543 = vdwg.mxu0
    %544 = vmatprep.subr.bf16.mxu0 %v408
    %545 = vmatpush1.bf16.msra.mxu0 %v407
    %546 = vmatprep.subr.bf16.mxu0 %v410
    %547 = vmatpush1.bf16.msra.mxu0 %v409
    %548 = vmatprep.subr.bf16.mxu0 %v412
    %549 = vmatpush1.bf16.msra.mxu0 %v411
    %550 = vmatprep.subr.bf16.mxu0 %v414
    %551 = vmatpush1.bf16.msra.mxu0 %v413
    %552 = vmatprep.subr.bf16.mxu0 %v416
    %553 = vmatpush1.bf16.msra.mxu0 %v415
    %554 = vmatprep.subr.bf16.mxu0 %v418
    %555 = vmatpush1.bf16.msra.mxu0 %v417
    %556 = vmatprep.subr.bf16.mxu0 %v420
    %557 = vmatpush1.bf16.msra.mxu0 %v419
    %558 = vmatprep.subr.bf16.mxu0 %v422
    %559 = vmatpush1.bf16.msra.mxu0 %v421
    %560 = vmatprep.subr.bf16.mxu0 %v424
    %561 = vmatpush1.bf16.msra.mxu0 %v423
    %562 = vmatprep.subr.bf16.mxu0 %v426
    %563 = vmatpush1.bf16.msra.mxu0 %v425
    %564 = vmatprep.subr.bf16.mxu0 %v428
    %565 = vmatpush1.bf16.msra.mxu0 %v427
    %566 = vmatprep.subr.bf16.mxu0 %v430
    %567 = vmatpush1.bf16.msra.mxu0 %v429
    %568 = vmatprep.subr.bf16.mxu0 %v432
    %569 = vmatpush1.bf16.msra.mxu0 %v431
    %570 = vmatprep.subr.bf16.mxu0 %v434
    %571 = vmatpush1.bf16.msra.mxu0 %v433
    %572 = vmatprep.subr.bf16.mxu0 %v436
    %573 = vmatpush1.bf16.msra.mxu0 %v435
    %574 = vmatprep.subr.bf16.mxu0 %v438
    %575 = vmatpush1.bf16.msra.mxu0 %v437
    %576 = vmatprep.mubr.bf16.mxu0 %v118
    %577 = vmatmul.mubr.bf16.gmra.mrb[0].mxu0 %v117
    %v578 = vpop.f32.mrb[0].mxu0
    %v579 = vadd.f32 %v538, %v578
    %v580 = vpop.f32.mrb[0].mxu0
    %v581 = vadd.f32 %v540, %v580
    %v582 = vpop.f32.mrb[0].mxu0
    %v583 = vpop.f32.mrb[0].mxu0
    %584 = vdwg.mxu0
    %v585 = vld [vmem:[%s6] sm:$0x3]
    %v586 = vld [vmem:[%s6 + $0x2] sm:$0x3]
    %v587 = vrot.slane %v579, 4
    %v588 = vadd.f32 %v579, %v587
    %v589 = vrot.slane %v588, 2
    %v590 = vadd.f32 %v588, %v589
    %v591 = vrot.slane %v590, 1
    %v592 = vadd.f32 %v590, %v591
    %v593 = vrot.slane %v581, 4
    %v594 = vadd.f32 %v581, %v593
    %v595 = vrot.slane %v594, 2
    %v596 = vadd.f32 %v594, %v595
    %v597 = vrot.slane %v596, 1
    %v598 = vadd.f32 %v596, %v597
    %v599 = vrcp.pop 8.0
    %v600 = vmul.f32 %v592, %v599
    %v601 = vmul.f32 %v598, %v599
    %v602 = vmul.f32 %v579, %v579
    %v603 = vmul.f32 %v581, %v581
    %v604 = vrot.slane %v602, 4
    %v605 = vadd.f32 %v602, %v604
    %v606 = vrot.slane %v605, 2
    %v607 = vadd.f32 %v605, %v606
    %v608 = vrot.slane %v607, 1
    %v609 = vadd.f32 %v607, %v608
    %v610 = vrot.slane %v603, 4
    %v611 = vadd.f32 %v603, %v610
    %v612 = vrot.slane %v611, 2
    %v613 = vadd.f32 %v611, %v612
    %v614 = vrot.slane %v613, 1
    %v615 = vadd.f32 %v613, %v614
    %v616 = vmul.f32 %v609, %v599
    %v617 = vmul.f32 %v615, %v599
    %v618 = vmul.f32 %v600, %v600
    %v619 = vmul.f32 %v601, %v601
    %v620 = vsub.f32 %v616, %v618
    %v621 = vsub.f32 %v617, %v619
    %v622 = vadd.f32 %v620, 1e-05
    %v623 = vadd.f32 %v621, 1e-05
    %v624 = vrsqrt.pop %v622
    %v625 = vrsqrt.pop %v623
    %v627 = vlaneseq
    %v628 = vshrl.u32 %v627, 7
    %v629 = vsub.s32 0, %v628
    %v630 = vrot.slane %v585, %v629
    %v631 = vlaneseq
    %v632 = vshrl.u32 %v631, 7
    %v633 = vsub.s32 1, %v632
    %v634 = vrot.slane %v585, %v633
    %v637 = vmul.f32 %v624, %v630
    %v638 = vmul.f32 %v625, %v634
    %v639 = vsub.f32 %v579, %v600
    %v640 = vsub.f32 %v581, %v601
    %v641 = vlaneseq
    %v642 = vshrl.u32 %v641, 7
    %v643 = vsub.s32 0, %v642
    %v644 = vrot.slane %v637, %v643
    %v645 = vlaneseq
    %v646 = vshrl.u32 %v645, 7
    %v647 = vsub.s32 0, %v646
    %v648 = vrot.slane %v638, %v647
    %v649 = vmul.f32 %v639, %v644
    %v650 = vmul.f32 %v640, %v648
    %v652 = vlaneseq
    %v653 = vshrl.u32 %v652, 7
    %v654 = vsub.s32 0, %v653
    %v655 = vrot.slane %v586, %v654
    %v656 = vlaneseq
    %v657 = vshrl.u32 %v656, 7
    %v658 = vsub.s32 1, %v657
    %v659 = vrot.slane %v586, %v658
    %v662 = vadd.f32 %v649, %v655
    %v663 = vadd.f32 %v650, %v659
    %v664 = vmax.f32 %v662, 0.0
    %v665 = vmax.f32 %v663, 0.0
    %v666 = vpack.c.bf16 %v664, %v664
    %v667 = vpack.c.bf16 %v665, %v665
    %v668 = vld [vmem:[#allocation7] sm:$0xf]
    %v669 = vld [vmem:[#allocation7 + $0x4] sm:$0xf]
    %v670 = vld [vmem:[#allocation7 + $0x8] sm:$0xf]
    %v671 = vld [vmem:[#allocation7 + $0xc] sm:$0xf]
    %v672 = vld [vmem:[#allocation7 + $0x10] sm:$0xf]
    %v673 = vld [vmem:[#allocation7 + $0x14] sm:$0xf]
    %v674 = vld [vmem:[#allocation7 + $0x18] sm:$0xf]
    %v675 = vld [vmem:[#allocation7 + $0x1c] sm:$0xf]
    %v676 = vld [vmem:[#allocation7 + $0x20] sm:$0xf]
    %v677 = vld [vmem:[#allocation7 + $0x24] sm:$0xf]
    %v678 = vld [vmem:[#allocation7 + $0x28] sm:$0xf]
    %v679 = vld [vmem:[#allocation7 + $0x2c] sm:$0xf]
    %v680 = vld [vmem:[#allocation7 + $0x30] sm:$0xf]
    %v681 = vld [vmem:[#allocation7 + $0x34] sm:$0xf]
    %v682 = vld [vmem:[#allocation7 + $0x38] sm:$0xf]
    %v683 = vld [vmem:[#allocation7 + $0x3c] sm:$0xf]
    %v684 = vld [vmem:[#allocation7 + $0x40] sm:$0xf]
    %v685 = vld [vmem:[#allocation7 + $0x44] sm:$0xf]
    %v686 = vld [vmem:[#allocation7 + $0x48] sm:$0xf]
    %v687 = vld [vmem:[#allocation7 + $0x4c] sm:$0xf]
    %v688 = vld [vmem:[#allocation7 + $0x50] sm:$0xf]
    %v689 = vld [vmem:[#allocation7 + $0x54] sm:$0xf]
    %v690 = vld [vmem:[#allocation7 + $0x58] sm:$0xf]
    %v691 = vld [vmem:[#allocation7 + $0x5c] sm:$0xf]
    %v692 = vld [vmem:[#allocation7 + $0x60] sm:$0xf]
    %v693 = vld [vmem:[#allocation7 + $0x64] sm:$0xf]
    %v694 = vld [vmem:[#allocation7 + $0x68] sm:$0xf]
    %v695 = vld [vmem:[#allocation7 + $0x6c] sm:$0xf]
    %v696 = vld [vmem:[#allocation7 + $0x70] sm:$0xf]
    %v697 = vld [vmem:[#allocation7 + $0x74] sm:$0xf]
    %v698 = vld [vmem:[#allocation7 + $0x78] sm:$0xf]
    %v699 = vld [vmem:[#allocation7 + $0x7c] sm:$0xf]
    %v732 = vunpack.c.l.b16 %v668
    %v733 = vunpack.c.l.b16 %v669
    %v734 = vunpack.c.l.b16 %v670
    %v735 = vunpack.c.l.b16 %v671
    %v736 = vunpack.c.l.b16 %v672
    %v737 = vunpack.c.l.b16 %v673
    %v738 = vunpack.c.l.b16 %v674
    %v739 = vunpack.c.l.b16 %v675
    %v740 = vunpack.c.l.b16 %v676
    %v741 = vunpack.c.l.b16 %v677
    %v742 = vunpack.c.l.b16 %v678
    %v743 = vunpack.c.l.b16 %v679
    %v744 = vunpack.c.l.b16 %v680
    %v745 = vunpack.c.l.b16 %v681
    %v746 = vunpack.c.l.b16 %v682
    %v747 = vunpack.c.l.b16 %v683
    %v748 = vunpack.c.l.b16 %v684
    %v749 = vunpack.c.l.b16 %v685
    %v750 = vunpack.c.l.b16 %v686
    %v751 = vunpack.c.l.b16 %v687
    %v752 = vunpack.c.l.b16 %v688
    %v753 = vunpack.c.l.b16 %v689
    %v754 = vunpack.c.l.b16 %v690
    %v755 = vunpack.c.l.b16 %v691
    %v756 = vunpack.c.l.b16 %v692
    %v757 = vunpack.c.l.b16 %v693
    %v758 = vunpack.c.l.b16 %v694
    %v759 = vunpack.c.l.b16 %v695
    %v760 = vunpack.c.l.b16 %v696
    %v761 = vunpack.c.l.b16 %v697
    %v762 = vunpack.c.l.b16 %v698
    %v763 = vunpack.c.l.b16 %v699
    %v764 = vpack.c.b16 %v733, %v732
    %v765 = vpack.c.b16 %v735, %v734
    %v766 = vpack.c.b16 %v737, %v736
    %v767 = vpack.c.b16 %v739, %v738
    %v768 = vpack.c.b16 %v741, %v740
    %v769 = vpack.c.b16 %v743, %v742
    %v770 = vpack.c.b16 %v745, %v744
    %v771 = vpack.c.b16 %v747, %v746
    %v772 = vpack.c.b16 %v749, %v748
    %v773 = vpack.c.b16 %v751, %v750
    %v774 = vpack.c.b16 %v753, %v752
    %v775 = vpack.c.b16 %v755, %v754
    %v776 = vpack.c.b16 %v757, %v756
    %v777 = vpack.c.b16 %v759, %v758
    %v778 = vpack.c.b16 %v761, %v760
    %v779 = vpack.c.b16 %v763, %v762
    %796 = vmatprep.subr.bf16.mxu0 0
    %797 = vmatpush1.bf16.msra.mxu0 %v764
    %798 = vmatprep.subr.bf16.mxu0 0
    %799 = vmatpush1.bf16.msra.mxu0 %v765
    %800 = vmatprep.subr.bf16.mxu0 0
    %801 = vmatpush1.bf16.msra.mxu0 %v766
    %802 = vmatprep.subr.bf16.mxu0 0
    %803 = vmatpush1.bf16.msra.mxu0 %v767
    %804 = vmatprep.subr.bf16.mxu0 0
    %805 = vmatpush1.bf16.msra.mxu0 %v768
    %806 = vmatprep.subr.bf16.mxu0 0
    %807 = vmatpush1.bf16.msra.mxu0 %v769
    %808 = vmatprep.subr.bf16.mxu0 0
    %809 = vmatpush1.bf16.msra.mxu0 %v770
    %810 = vmatprep.subr.bf16.mxu0 0
    %811 = vmatpush1.bf16.msra.mxu0 %v771
    %812 = vmatprep.subr.bf16.mxu0 0
    %813 = vmatpush1.bf16.msra.mxu0 %v772
    %814 = vmatprep.subr.bf16.mxu0 0
    %815 = vmatpush1.bf16.msra.mxu0 %v773
    %816 = vmatprep.subr.bf16.mxu0 0
    %817 = vmatpush1.bf16.msra.mxu0 %v774
    %818 = vmatprep.subr.bf16.mxu0 0
    %819 = vmatpush1.bf16.msra.mxu0 %v775
    %820 = vmatprep.subr.bf16.mxu0 0
    %821 = vmatpush1.bf16.msra.mxu0 %v776
    %822 = vmatprep.subr.bf16.mxu0 0
    %823 = vmatpush1.bf16.msra.mxu0 %v777
    %824 = vmatprep.subr.bf16.mxu0 0
    %825 = vmatpush1.bf16.msra.mxu0 %v778
    %826 = vmatprep.subr.bf16.mxu0 0
    %827 = vmatpush1.bf16.msra.mxu0 %v779
    %828 = vmatprep.mubr.bf16.mxu0 %v667
    %829 = vmatmul.mubr.bf16.gmra.mrb[0].mxu0 %v666
    %v830 = vpop.f32.mrb[0].mxu0
    %v831 = vadd.f32 0.0, %v830
    %v832 = vpop.f32.mrb[0].mxu0
    %v833 = vpop.f32.mrb[0].mxu0
    %v834 = vpop.f32.mrb[0].mxu0
    %835 = vdwg.mxu0
    %v836 = vld [vmem:[%s6 + $0x4] sm:$0x1]
    %v837 = vld [vmem:[%s6 + $0x5] sm:$0x1]
    %v838 = vrot.slane %v831, 4
    %v839 = vadd.f32 %v831, %v838
    %v840 = vrot.slane %v839, 2
    %v841 = vadd.f32 %v839, %v840
    %v842 = vrot.slane %v841, 1
    %v843 = vadd.f32 %v841, %v842
    %v844 = vmul.f32 %v843, %v599
    %v845 = vmul.f32 %v831, %v831
    %v846 = vrot.slane %v845, 4
    %v847 = vadd.f32 %v845, %v846
    %v848 = vrot.slane %v847, 2
    %v849 = vadd.f32 %v847, %v848
    %v850 = vrot.slane %v849, 1
    %v851 = vadd.f32 %v849, %v850
    %v852 = vmul.f32 %v851, %v599
    %v853 = vmul.f32 %v844, %v844
    %v854 = vsub.f32 %v852, %v853
    %v855 = vadd.f32 %v854, 1e-05
    %v856 = vrsqrt.pop %v855
    %v857 = vmul.f32 %v856, %v836
    %v858 = vsub.f32 %v831, %v844
    %v859 = vlaneseq
    %v860 = vshrl.u32 %v859, 7
    %v861 = vsub.s32 0, %v860
    %v862 = vrot.slane %v857, %v861
    %v863 = vmul.f32 %v858, %v862
    %v865 = vlaneseq
    %v866 = vshrl.u32 %v865, 7
    %v867 = vsub.s32 0, %v866
    %v868 = vrot.slane %v837, %v867
    %v870 = vadd.f32 %v863, %v868
    %v871 = vmax.f32 %v870, 0.0
    %v872 = vpack.c.bf16 %v871, %v871
    %v873 = vld [vmem:[#allocation8] sm:$0xff]
    %v874 = vld [vmem:[#allocation8 + $0x8] sm:$0xff]
    %v875 = vld [vmem:[#allocation8 + $0x10] sm:$0xff]
    %v876 = vld [vmem:[#allocation8 + $0x18] sm:$0xff]
    %v877 = vld [vmem:[#allocation8 + $0x20] sm:$0xff]
    %v878 = vld [vmem:[#allocation8 + $0x28] sm:$0xff]
    %v879 = vld [vmem:[#allocation8 + $0x30] sm:$0xff]
    %v880 = vld [vmem:[#allocation8 + $0x38] sm:$0xff]
    %v881 = vld [vmem:[#allocation8 + $0x40] sm:$0xff]
    %v882 = vld [vmem:[#allocation8 + $0x48] sm:$0xff]
    %v883 = vld [vmem:[#allocation8 + $0x50] sm:$0xff]
    %v884 = vld [vmem:[#allocation8 + $0x58] sm:$0xff]
    %v885 = vld [vmem:[#allocation8 + $0x60] sm:$0xff]
    %v886 = vld [vmem:[#allocation8 + $0x68] sm:$0xff]
    %v887 = vld [vmem:[#allocation8 + $0x70] sm:$0xff]
    %v888 = vld [vmem:[#allocation8 + $0x78] sm:$0xff]
    %v905 = vunpack.c.l.b16 %v873
    %v906 = vunpack.c.h.b16 %v873
    %v907 = vunpack.c.l.b16 %v874
    %v908 = vunpack.c.h.b16 %v874
    %v909 = vunpack.c.l.b16 %v875
    %v910 = vunpack.c.h.b16 %v875
    %v911 = vunpack.c.l.b16 %v876
    %v912 = vunpack.c.h.b16 %v876
    %v913 = vunpack.c.l.b16 %v877
    %v914 = vunpack.c.h.b16 %v877
    %v915 = vunpack.c.l.b16 %v878
    %v916 = vunpack.c.h.b16 %v878
    %v917 = vunpack.c.l.b16 %v879
    %v918 = vunpack.c.h.b16 %v879
    %v919 = vunpack.c.l.b16 %v880
    %v920 = vunpack.c.h.b16 %v880
    %v921 = vunpack.c.l.b16 %v881
    %v922 = vunpack.c.h.b16 %v881
    %v923 = vunpack.c.l.b16 %v882
    %v924 = vunpack.c.h.b16 %v882
    %v925 = vunpack.c.l.b16 %v883
    %v926 = vunpack.c.h.b16 %v883
    %v927 = vunpack.c.l.b16 %v884
    %v928 = vunpack.c.h.b16 %v884
    %v929 = vunpack.c.l.b16 %v885
    %v930 = vunpack.c.h.b16 %v885
    %v931 = vunpack.c.l.b16 %v886
    %v932 = vunpack.c.h.b16 %v886
    %v933 = vunpack.c.l.b16 %v887
    %v934 = vunpack.c.h.b16 %v887
    %v935 = vunpack.c.l.b16 %v888
    %v936 = vunpack.c.h.b16 %v888
    %v937 = vpack.c.b16 %v907, %v905
    %v938 = vpack.c.b16 %v908, %v906
    %v939 = vpack.c.b16 %v911, %v909
    %v940 = vpack.c.b16 %v912, %v910
    %v941 = vpack.c.b16 %v915, %v913
    %v942 = vpack.c.b16 %v916, %v914
    %v943 = vpack.c.b16 %v919, %v917
    %v944 = vpack.c.b16 %v920, %v918
    %v945 = vpack.c.b16 %v923, %v921
    %v946 = vpack.c.b16 %v924, %v922
    %v947 = vpack.c.b16 %v927, %v925
    %v948 = vpack.c.b16 %v928, %v926
    %v949 = vpack.c.b16 %v931, %v929
    %v950 = vpack.c.b16 %v932, %v930
    %v951 = vpack.c.b16 %v935, %v933
    %v952 = vpack.c.b16 %v936, %v934
    %969 = vmatprep.subr.bf16.mxu0 %v938
    %970 = vmatpush1.bf16.msra.mxu0 %v937
    %971 = vmatprep.subr.bf16.mxu0 %v940
    %972 = vmatpush1.bf16.msra.mxu0 %v939
    %973 = vmatprep.subr.bf16.mxu0 %v942
    %974 = vmatpush1.bf16.msra.mxu0 %v941
    %975 = vmatprep.subr.bf16.mxu0 %v944
    %976 = vmatpush1.bf16.msra.mxu0 %v943
    %977 = vmatprep.subr.bf16.mxu0 %v946
    %978 = vmatpush1.bf16.msra.mxu0 %v945
    %979 = vmatprep.subr.bf16.mxu0 %v948
    %980 = vmatpush1.bf16.msra.mxu0 %v947
    %981 = vmatprep.subr.bf16.mxu0 %v950
    %982 = vmatpush1.bf16.msra.mxu0 %v949
    %983 = vmatprep.subr.bf16.mxu0 %v952
    %984 = vmatpush1.bf16.msra.mxu0 %v951
    %985 = vmatprep.subr.bf16.mxu0 0
    %986 = vmatpush1.bf16.msra.mxu0 0
    %987 = vmatprep.subr.bf16.mxu0 0
    %988 = vmatpush1.bf16.msra.mxu0 0
    %989 = vmatprep.subr.bf16.mxu0 0
    %990 = vmatpush1.bf16.msra.mxu0 0
    %991 = vmatprep.subr.bf16.mxu0 0
    %992 = vmatpush1.bf16.msra.mxu0 0
    %993 = vmatprep.subr.bf16.mxu0 0
    %994 = vmatpush1.bf16.msra.mxu0 0
    %995 = vmatprep.subr.bf16.mxu0 0
    %996 = vmatpush1.bf16.msra.mxu0 0
    %997 = vmatprep.subr.bf16.mxu0 0
    %998 = vmatpush1.bf16.msra.mxu0 0
    %999 = vmatprep.subr.bf16.mxu0 0
    %1000 = vmatpush1.bf16.msra.mxu0 0
    %1001 = vmatprep.mubr.bf16.mxu0 0
    %1002 = vmatmul.mubr.bf16.gmra.mrb[0].mxu0 %v872
    %v1003 = vpop.f32.mrb[0].mxu0
    %v1004 = vadd.f32 0.0, %v1003
    %v1005 = vpop.f32.mrb[0].mxu0
    %v1006 = vadd.f32 0.0, %v1005
    %v1007 = vpop.f32.mrb[0].mxu0
    %v1008 = vpop.f32.mrb[0].mxu0
    %1009 = vdwg.mxu0
    %v1010 = vld [vmem:[%s6 + $0x6] sm:$0x3]
    %v1011 = vld [vmem:[%s6 + $0x8] sm:$0x3]
    %v1012 = vrot.slane %v1004, 4
    %v1013 = vadd.f32 %v1004, %v1012
    %v1014 = vrot.slane %v1013, 2
    %v1015 = vadd.f32 %v1013, %v1014
    %v1016 = vrot.slane %v1015, 1
    %v1017 = vadd.f32 %v1015, %v1016
    %v1018 = vrot.slane %v1006, 4
    %v1019 = vadd.f32 %v1006, %v1018
    %v1020 = vrot.slane %v1019, 2
    %v1021 = vadd.f32 %v1019, %v1020
    %v1022 = vrot.slane %v1021, 1
    %v1023 = vadd.f32 %v1021, %v1022
    %v1024 = vmul.f32 %v1017, %v599
    %v1025 = vmul.f32 %v1023, %v599
    %v1026 = vmul.f32 %v1004, %v1004
    %v1027 = vmul.f32 %v1006, %v1006
    %v1028 = vrot.slane %v1026, 4
    %v1029 = vadd.f32 %v1026, %v1028
    %v1030 = vrot.slane %v1029, 2
    %v1031 = vadd.f32 %v1029, %v1030
    %v1032 = vrot.slane %v1031, 1
    %v1033 = vadd.f32 %v1031, %v1032
    %v1034 = vrot.slane %v1027, 4
    %v1035 = vadd.f32 %v1027, %v1034
    %v1036 = vrot.slane %v1035, 2
    %v1037 = vadd.f32 %v1035, %v1036
    %v1038 = vrot.slane %v1037, 1
    %v1039 = vadd.f32 %v1037, %v1038
    %v1040 = vmul.f32 %v1033, %v599
    %v1041 = vmul.f32 %v1039, %v599
    %v1042 = vmul.f32 %v1024, %v1024
    %v1043 = vmul.f32 %v1025, %v1025
    %v1044 = vsub.f32 %v1040, %v1042
    %v1045 = vsub.f32 %v1041, %v1043
    %v1046 = vadd.f32 %v1044, 1e-05
    %v1047 = vadd.f32 %v1045, 1e-05
    %v1048 = vrsqrt.pop %v1046
    %v1049 = vrsqrt.pop %v1047
    %v1051 = vlaneseq
    %v1052 = vshrl.u32 %v1051, 7
    %v1053 = vsub.s32 0, %v1052
    %v1054 = vrot.slane %v1010, %v1053
    %v1055 = vlaneseq
    %v1056 = vshrl.u32 %v1055, 7
    %v1057 = vsub.s32 1, %v1056
    %v1058 = vrot.slane %v1010, %v1057
    %v1061 = vmul.f32 %v1048, %v1054
    %v1062 = vmul.f32 %v1049, %v1058
    %v1063 = vsub.f32 %v1004, %v1024
    %v1064 = vsub.f32 %v1006, %v1025
    %v1065 = vlaneseq
    %v1066 = vshrl.u32 %v1065, 7
    %v1067 = vsub.s32 0, %v1066
    %v1068 = vrot.slane %v1061, %v1067
    %v1069 = vlaneseq
    %v1070 = vshrl.u32 %v1069, 7
    %v1071 = vsub.s32 0, %v1070
    %v1072 = vrot.slane %v1062, %v1071
    %v1073 = vmul.f32 %v1063, %v1068
    %v1074 = vmul.f32 %v1064, %v1072
    %v1076 = vlaneseq
    %v1077 = vshrl.u32 %v1076, 7
    %v1078 = vsub.s32 0, %v1077
    %v1079 = vrot.slane %v1011, %v1078
    %v1080 = vlaneseq
    %v1081 = vshrl.u32 %v1080, 7
    %v1082 = vsub.s32 1, %v1081
    %v1083 = vrot.slane %v1011, %v1082
    %v1086 = vadd.f32 %v1073, %v1079
    %v1087 = vadd.f32 %v1074, %v1083
    %v1088 = vmax.f32 %v1086, 0.0
    %v1089 = vmax.f32 %v1087, 0.0
    %v1090 = vpack.c.bf16 %v1088, %v1088
    %v1091 = vpack.c.bf16 %v1089, %v1089
    %v1092 = vld [vmem:[#allocation10] sm:$0xff]
    %v1093 = vld [vmem:[#allocation10 + $0x8] sm:$0xff]
    %v1094 = vld [vmem:[#allocation10 + $0x10] sm:$0xff]
    %v1095 = vld [vmem:[#allocation10 + $0x18] sm:$0xff]
    %v1096 = vld [vmem:[#allocation10 + $0x20] sm:$0xff]
    %v1097 = vld [vmem:[#allocation10 + $0x28] sm:$0xff]
    %v1098 = vld [vmem:[#allocation10 + $0x30] sm:$0xff]
    %v1099 = vld [vmem:[#allocation10 + $0x38] sm:$0xff]
    %v1100 = vld [vmem:[#allocation10 + $0x40] sm:$0xff]
    %v1101 = vld [vmem:[#allocation10 + $0x48] sm:$0xff]
    %v1102 = vld [vmem:[#allocation10 + $0x50] sm:$0xff]
    %v1103 = vld [vmem:[#allocation10 + $0x58] sm:$0xff]
    %v1104 = vld [vmem:[#allocation10 + $0x60] sm:$0xff]
    %v1105 = vld [vmem:[#allocation10 + $0x68] sm:$0xff]
    %v1106 = vld [vmem:[#allocation10 + $0x70] sm:$0xff]
    %v1107 = vld [vmem:[#allocation10 + $0x78] sm:$0xff]
    %v1108 = vld [vmem:[#allocation10 + $0x80] sm:$0xff]
    %v1109 = vld [vmem:[#allocation10 + $0x88] sm:$0xff]
    %v1110 = vld [vmem:[#allocation10 + $0x90] sm:$0xff]
    %v1111 = vld [vmem:[#allocation10 + $0x98] sm:$0xff]
    %v1112 = vld [vmem:[#allocation10 + $0xa0] sm:$0xff]
    %v1113 = vld [vmem:[#allocation10 + $0xa8] sm:$0xff]
    %v1114 = vld [vmem:[#allocation10 + $0xb0] sm:$0xff]
    %v1115 = vld [vmem:[#allocation10 + $0xb8] sm:$0xff]
    %v1116 = vld [vmem:[#allocation10 + $0xc0] sm:$0xff]
    %v1117 = vld [vmem:[#allocation10 + $0xc8] sm:$0xff]
    %v1118 = vld [vmem:[#allocation10 + $0xd0] sm:$0xff]
    %v1119 = vld [vmem:[#allocation10 + $0xd8] sm:$0xff]
    %v1120 = vld [vmem:[#allocation10 + $0xe0] sm:$0xff]
    %v1121 = vld [vmem:[#allocation10 + $0xe8] sm:$0xff]
    %v1122 = vld [vmem:[#allocation10 + $0xf0] sm:$0xff]
    %v1123 = vld [vmem:[#allocation10 + $0xf8] sm:$0xff]
    %v1124 = vld [vmem:[#allocation10 + $0x100] sm:$0xff]
    %v1125 = vld [vmem:[#allocation10 + $0x108] sm:$0xff]
    %v1126 = vld [vmem:[#allocation10 + $0x110] sm:$0xff]
    %v1127 = vld [vmem:[#allocation10 + $0x118] sm:$0xff]
    %v1128 = vld [vmem:[#allocation10 + $0x120] sm:$0xff]
    %v1129 = vld [vmem:[#allocation10 + $0x128] sm:$0xff]
    %v1130 = vld [vmem:[#allocation10 + $0x130] sm:$0xff]
    %v1131 = vld [vmem:[#allocation10 + $0x138] sm:$0xff]
    %v1132 = vld [vmem:[#allocation10 + $0x140] sm:$0xff]
    %v1133 = vld [vmem:[#allocation10 + $0x148] sm:$0xff]
    %v1134 = vld [vmem:[#allocation10 + $0x150] sm:$0xff]
    %v1135 = vld [vmem:[#allocation10 + $0x158] sm:$0xff]
    %v1136 = vld [vmem:[#allocation10 + $0x160] sm:$0xff]
    %v1137 = vld [vmem:[#allocation10 + $0x168] sm:$0xff]
    %v1138 = vld [vmem:[#allocation10 + $0x170] sm:$0xff]
    %v1139 = vld [vmem:[#allocation10 + $0x178] sm:$0xff]
    %v1140 = vld [vmem:[#allocation10 + $0x180] sm:$0xff]
    %v1141 = vld [vmem:[#allocation10 + $0x188] sm:$0xff]
    %v1142 = vld [vmem:[#allocation10 + $0x190] sm:$0xff]
    %v1143 = vld [vmem:[#allocation10 + $0x198] sm:$0xff]
    %v1144 = vld [vmem:[#allocation10 + $0x1a0] sm:$0xff]
    %v1145 = vld [vmem:[#allocation10 + $0x1a8] sm:$0xff]
    %v1146 = vld [vmem:[#allocation10 + $0x1b0] sm:$0xff]
    %v1147 = vld [vmem:[#allocation10 + $0x1b8] sm:$0xff]
    %v1148 = vld [vmem:[#allocation10 + $0x1c0] sm:$0xff]
    %v1149 = vld [vmem:[#allocation10 + $0x1c8] sm:$0xff]
    %v1150 = vld [vmem:[#allocation10 + $0x1d0] sm:$0xff]
    %v1151 = vld [vmem:[#allocation10 + $0x1d8] sm:$0xff]
    %v1152 = vld [vmem:[#allocation10 + $0x1e0] sm:$0xff]
    %v1153 = vld [vmem:[#allocation10 + $0x1e8] sm:$0xff]
    %v1154 = vld [vmem:[#allocation10 + $0x1f0] sm:$0xff]
    %v1155 = vld [vmem:[#allocation10 + $0x1f8] sm:$0xff]
    %v1220 = vunpack.c.l.b16 %v1092
    %v1221 = vunpack.c.h.b16 %v1092
    %v1222 = vunpack.c.l.b16 %v1093
    %v1223 = vunpack.c.h.b16 %v1093
    %v1224 = vunpack.c.l.b16 %v1094
    %v1225 = vunpack.c.h.b16 %v1094
    %v1226 = vunpack.c.l.b16 %v1095
    %v1227 = vunpack.c.h.b16 %v1095
    %v1228 = vunpack.c.l.b16 %v1096
    %v1229 = vunpack.c.h.b16 %v1096
    %v1230 = vunpack.c.l.b16 %v1097
    %v1231 = vunpack.c.h.b16 %v1097
    %v1232 = vunpack.c.l.b16 %v1098
    %v1233 = vunpack.c.h.b16 %v1098
    %v1234 = vunpack.c.l.b16 %v1099
    %v1235 = vunpack.c.h.b16 %v1099
    %v1236 = vunpack.c.l.b16 %v1100
    %v1237 = vunpack.c.h.b16 %v1100
    %v1238 = vunpack.c.l.b16 %v1101
    %v1239 = vunpack.c.h.b16 %v1101
    %v1240 = vunpack.c.l.b16 %v1102
    %v1241 = vunpack.c.h.b16 %v1102
    %v1242 = vunpack.c.l.b16 %v1103
    %v1243 = vunpack.c.h.b16 %v1103
    %v1244 = vunpack.c.l.b16 %v1104
    %v1245 = vunpack.c.h.b16 %v1104
    %v1246 = vunpack.c.l.b16 %v1105
    %v1247 = vunpack.c.h.b16 %v1105
    %v1248 = vunpack.c.l.b16 %v1106
    %v1249 = vunpack.c.h.b16 %v1106
    %v1250 = vunpack.c.l.b16 %v1107
    %v1251 = vunpack.c.h.b16 %v1107
    %v1252 = vunpack.c.l.b16 %v1108
    %v1253 = vunpack.c.h.b16 %v1108
    %v1254 = vunpack.c.l.b16 %v1109
    %v1255 = vunpack.c.h.b16 %v1109
    %v1256 = vunpack.c.l.b16 %v1110
    %v1257 = vunpack.c.h.b16 %v1110
    %v1258 = vunpack.c.l.b16 %v1111
    %v1259 = vunpack.c.h.b16 %v1111
    %v1260 = vunpack.c.l.b16 %v1112
    %v1261 = vunpack.c.h.b16 %v1112
    %v1262 = vunpack.c.l.b16 %v1113
    %v1263 = vunpack.c.h.b16 %v1113
    %v1264 = vunpack.c.l.b16 %v1114
    %v1265 = vunpack.c.h.b16 %v1114
    %v1266 = vunpack.c.l.b16 %v1115
    %v1267 = vunpack.c.h.b16 %v1115
    %v1268 = vunpack.c.l.b16 %v1116
    %v1269 = vunpack.c.h.b16 %v1116
    %v1270 = vunpack.c.l.b16 %v1117
    %v1271 = vunpack.c.h.b16 %v1117
    %v1272 = vunpack.c.l.b16 %v1118
    %v1273 = vunpack.c.h.b16 %v1118
    %v1274 = vunpack.c.l.b16 %v1119
    %v1275 = vunpack.c.h.b16 %v1119
    %v1276 = vunpack.c.l.b16 %v1120
    %v1277 = vunpack.c.h.b16 %v1120
    %v1278 = vunpack.c.l.b16 %v1121
    %v1279 = vunpack.c.h.b16 %v1121
    %v1280 = vunpack.c.l.b16 %v1122
    %v1281 = vunpack.c.h.b16 %v1122
    %v1282 = vunpack.c.l.b16 %v1123
    %v1283 = vunpack.c.h.b16 %v1123
    %v1284 = vunpack.c.l.b16 %v1124
    %v1285 = vunpack.c.h.b16 %v1124
    %v1286 = vunpack.c.l.b16 %v1125
    %v1287 = vunpack.c.h.b16 %v1125
    %v1288 = vunpack.c.l.b16 %v1126
    %v1289 = vunpack.c.h.b16 %v1126
    %v1290 = vunpack.c.l.b16 %v1127
    %v1291 = vunpack.c.h.b16 %v1127
    %v1292 = vunpack.c.l.b16 %v1128
    %v1293 = vunpack.c.h.b16 %v1128
    %v1294 = vunpack.c.l.b16 %v1129
    %v1295 = vunpack.c.h.b16 %v1129
    %v1296 = vunpack.c.l.b16 %v1130
    %v1297 = vunpack.c.h.b16 %v1130
    %v1298 = vunpack.c.l.b16 %v1131
    %v1299 = vunpack.c.h.b16 %v1131
    %v1300 = vunpack.c.l.b16 %v1132
    %v1301 = vunpack.c.h.b16 %v1132
    %v1302 = vunpack.c.l.b16 %v1133
    %v1303 = vunpack.c.h.b16 %v1133
    %v1304 = vunpack.c.l.b16 %v1134
    %v1305 = vunpack.c.h.b16 %v1134
    %v1306 = vunpack.c.l.b16 %v1135
    %v1307 = vunpack.c.h.b16 %v1135
    %v1308 = vunpack.c.l.b16 %v1136
    %v1309 = vunpack.c.h.b16 %v1136
    %v1310 = vunpack.c.l.b16 %v1137
    %v1311 = vunpack.c.h.b16 %v1137
    %v1312 = vunpack.c.l.b16 %v1138
    %v1313 = vunpack.c.h.b16 %v1138
    %v1314 = vunpack.c.l.b16 %v1139
    %v1315 = vunpack.c.h.b16 %v1139
    %v1316 = vunpack.c.l.b16 %v1140
    %v1317 = vunpack.c.h.b16 %v1140
    %v1318 = vunpack.c.l.b16 %v1141
    %v1319 = vunpack.c.h.b16 %v1141
    %v1320 = vunpack.c.l.b16 %v1142
    %v1321 = vunpack.c.h.b16 %v1142
    %v1322 = vunpack.c.l.b16 %v1143
    %v1323 = vunpack.c.h.b16 %v1143
    %v1324 = vunpack.c.l.b16 %v1144
    %v1325 = vunpack.c.h.b16 %v1144
    %v1326 = vunpack.c.l.b16 %v1145
    %v1327 = vunpack.c.h.b16 %v1145
    %v1328 = vunpack.c.l.b16 %v1146
    %v1329 = vunpack.c.h.b16 %v1146
    %v1330 = vunpack.c.l.b16 %v1147
    %v1331 = vunpack.c.h.b16 %v1147
    %v1332 = vunpack.c.l.b16 %v1148
    %v1333 = vunpack.c.h.b16 %v1148
    %v1334 = vunpack.c.l.b16 %v1149
    %v1335 = vunpack.c.h.b16 %v1149
    %v1336 = vunpack.c.l.b16 %v1150
    %v1337 = vunpack.c.h.b16 %v1150
    %v1338 = vunpack.c.l.b16 %v1151
    %v1339 = vunpack.c.h.b16 %v1151
    %v1340 = vunpack.c.l.b16 %v1152
    %v1341 = vunpack.c.h.b16 %v1152
    %v1342 = vunpack.c.l.b16 %v1153
    %v1343 = vunpack.c.h.b16 %v1153
    %v1344 = vunpack.c.l.b16 %v1154
    %v1345 = vunpack.c.h.b16 %v1154
    %v1346 = vunpack.c.l.b16 %v1155
    %v1347 = vunpack.c.h.b16 %v1155
    %v1348 = vpack.c.b16 %v1224, %v1220
    %v1349 = vpack.c.b16 %v1225, %v1221
    %v1350 = vpack.c.b16 %v1226, %v1222
    %v1351 = vpack.c.b16 %v1227, %v1223
    %v1352 = vpack.c.b16 %v1232, %v1228
    %v1353 = vpack.c.b16 %v1233, %v1229
    %v1354 = vpack.c.b16 %v1234, %v1230
    %v1355 = vpack.c.b16 %v1235, %v1231
    %v1356 = vpack.c.b16 %v1240, %v1236
    %v1357 = vpack.c.b16 %v1241, %v1237
    %v1358 = vpack.c.b16 %v1242, %v1238
    %v1359 = vpack.c.b16 %v1243, %v1239
    %v1360 = vpack.c.b16 %v1248, %v1244
    %v1361 = vpack.c.b16 %v1249, %v1245
    %v1362 = vpack.c.b16 %v1250, %v1246
    %v1363 = vpack.c.b16 %v1251, %v1247
    %v1364 = vpack.c.b16 %v1256, %v1252
    %v1365 = vpack.c.b16 %v1257, %v1253
    %v1366 = vpack.c.b16 %v1258, %v1254
    %v1367 = vpack.c.b16 %v1259, %v1255
    %v1368 = vpack.c.b16 %v1264, %v1260
    %v1369 = vpack.c.b16 %v1265, %v1261
    %v1370 = vpack.c.b16 %v1266, %v1262
    %v1371 = vpack.c.b16 %v1267, %v1263
    %v1372 = vpack.c.b16 %v1272, %v1268
    %v1373 = vpack.c.b16 %v1273, %v1269
    %v1374 = vpack.c.b16 %v1274, %v1270
    %v1375 = vpack.c.b16 %v1275, %v1271
    %v1376 = vpack.c.b16 %v1280, %v1276
    %v1377 = vpack.c.b16 %v1281, %v1277
    %v1378 = vpack.c.b16 %v1282, %v1278
    %v1379 = vpack.c.b16 %v1283, %v1279
    %v1380 = vpack.c.b16 %v1288, %v1284
    %v1381 = vpack.c.b16 %v1289, %v1285
    %v1382 = vpack.c.b16 %v1290, %v1286
    %v1383 = vpack.c.b16 %v1291, %v1287
    %v1384 = vpack.c.b16 %v1296, %v1292
    %v1385 = vpack.c.b16 %v1297, %v1293
    %v1386 = vpack.c.b16 %v1298, %v1294
    %v1387 = vpack.c.b16 %v1299, %v1295
    %v1388 = vpack.c.b16 %v1304, %v1300
    %v1389 = vpack.c.b16 %v1305, %v1301
    %v1390 = vpack.c.b16 %v1306, %v1302
    %v1391 = vpack.c.b16 %v1307, %v1303
    %v1392 = vpack.c.b16 %v1312, %v1308
    %v1393 = vpack.c.b16 %v1313, %v1309
    %v1394 = vpack.c.b16 %v1314, %v1310
    %v1395 = vpack.c.b16 %v1315, %v1311
    %v1396 = vpack.c.b16 %v1320, %v1316
    %v1397 = vpack.c.b16 %v1321, %v1317
    %v1398 = vpack.c.b16 %v1322, %v1318
    %v1399 = vpack.c.b16 %v1323, %v1319
    %v1400 = vpack.c.b16 %v1328, %v1324
    %v1401 = vpack.c.b16 %v1329, %v1325
    %v1402 = vpack.c.b16 %v1330, %v1326
    %v1403 = vpack.c.b16 %v1331, %v1327
    %v1404 = vpack.c.b16 %v1336, %v1332
    %v1405 = vpack.c.b16 %v1337, %v1333
    %v1406 = vpack.c.b16 %v1338, %v1334
    %v1407 = vpack.c.b16 %v1339, %v1335
    %v1408 = vpack.c.b16 %v1344, %v1340
    %v1409 = vpack.c.b16 %v1345, %v1341
    %v1410 = vpack.c.b16 %v1346, %v1342
    %v1411 = vpack.c.b16 %v1347, %v1343
    %1476 = vmatprep.subr.bf16.mxu0 %v1349
    %1477 = vmatpush1.bf16.msra.mxu0 %v1348
    %1478 = vmatprep.subr.bf16.mxu0 %v1353
    %1479 = vmatpush1.bf16.msra.mxu0 %v1352
    %1480 = vmatprep.subr.bf16.mxu0 %v1357
    %1481 = vmatpush1.bf16.msra.mxu0 %v1356
    %1482 = vmatprep.subr.bf16.mxu0 %v1361
    %1483 = vmatpush1.bf16.msra.mxu0 %v1360
    %1484 = vmatprep.subr.bf16.mxu0 %v1365
    %1485 = vmatpush1.bf16.msra.mxu0 %v1364
    %1486 = vmatprep.subr.bf16.mxu0 %v1369
    %1487 = vmatpush1.bf16.msra.mxu0 %v1368
    %1488 = vmatprep.subr.bf16.mxu0 %v1373
    %1489 = vmatpush1.bf16.msra.mxu0 %v1372
    %1490 = vmatprep.subr.bf16.mxu0 %v1377
    %1491 = vmatpush1.bf16.msra.mxu0 %v1376
    %1492 = vmatprep.subr.bf16.mxu0 %v1381
    %1493 = vmatpush1.bf16.msra.mxu0 %v1380
    %1494 = vmatprep.subr.bf16.mxu0 %v1385
    %1495 = vmatpush1.bf16.msra.mxu0 %v1384
    %1496 = vmatprep.subr.bf16.mxu0 %v1389
    %1497 = vmatpush1.bf16.msra.mxu0 %v1388
    %1498 = vmatprep.subr.bf16.mxu0 %v1393
    %1499 = vmatpush1.bf16.msra.mxu0 %v1392
    %1500 = vmatprep.subr.bf16.mxu0 %v1397
    %1501 = vmatpush1.bf16.msra.mxu0 %v1396
    %1502 = vmatprep.subr.bf16.mxu0 %v1401
    %1503 = vmatpush1.bf16.msra.mxu0 %v1400
    %1504 = vmatprep.subr.bf16.mxu0 %v1405
    %1505 = vmatpush1.bf16.msra.mxu0 %v1404
    %1506 = vmatprep.subr.bf16.mxu0 %v1409
    %1507 = vmatpush1.bf16.msra.mxu0 %v1408
    %1508 = vmatprep.mubr.bf16.mxu0 %v1091
    %1509 = vmatmul.mubr.bf16.gmra.mrb[0].mxu0 %v1090
    %v1510 = vpop.f32.mrb[0].mxu0
    %v1511 = vadd.f32 0.0, %v1510
    %v1512 = vpop.f32.mrb[0].mxu0
    %v1513 = vadd.f32 0.0, %v1512
    %v1514 = vpop.f32.mrb[0].mxu0
    %v1515 = vpop.f32.mrb[0].mxu0
    %1516 = vdwg.mxu0
    %1517 = vmatprep.subr.bf16.mxu0 %v1351
    %1518 = vmatpush1.bf16.msra.mxu0 %v1350
    %1519 = vmatprep.subr.bf16.mxu0 %v1355
    %1520 = vmatpush1.bf16.msra.mxu0 %v1354
    %1521 = vmatprep.subr.bf16.mxu0 %v1359
    %1522 = vmatpush1.bf16.msra.mxu0 %v1358
    %1523 = vmatprep.subr.bf16.mxu0 %v1363
    %1524 = vmatpush1.bf16.msra.mxu0 %v1362
    %1525 = vmatprep.subr.bf16.mxu0 %v1367
    %1526 = vmatpush1.bf16.msra.mxu0 %v1366
    %1527 = vmatprep.subr.bf16.mxu0 %v1371
    %1528 = vmatpush1.bf16.msra.mxu0 %v1370
    %1529 = vmatprep.subr.bf16.mxu0 %v1375
    %1530 = vmatpush1.bf16.msra.mxu0 %v1374
    %1531 = vmatprep.subr.bf16.mxu0 %v1379
    %1532 = vmatpush1.bf16.msra.mxu0 %v1378
    %1533 = vmatprep.subr.bf16.mxu0 %v1383
    %1534 = vmatpush1.bf16.msra.mxu0 %v1382
    %1535 = vmatprep.subr.bf16.mxu0 %v1387
    %1536 = vmatpush1.bf16.msra.mxu0 %v1386
    %1537 = vmatprep.subr.bf16.mxu0 %v1391
    %1538 = vmatpush1.bf16.msra.mxu0 %v1390
    %1539 = vmatprep.subr.bf16.mxu0 %v1395
    %1540 = vmatpush1.bf16.msra.mxu0 %v1394
    %1541 = vmatprep.subr.bf16.mxu0 %v1399
    %1542 = vmatpush1.bf16.msra.mxu0 %v1398
    %1543 = vmatprep.subr.bf16.mxu0 %v1403
    %1544 = vmatpush1.bf16.msra.mxu0 %v1402
    %1545 = vmatprep.subr.bf16.mxu0 %v1407
    %1546 = vmatpush1.bf16.msra.mxu0 %v1406
    %1547 = vmatprep.subr.bf16.mxu0 %v1411
    %1548 = vmatpush1.bf16.msra.mxu0 %v1410
    %1549 = vmatprep.mubr.bf16.mxu0 %v1091
    %1550 = vmatmul.mubr.bf16.gmra.mrb[0].mxu0 %v1090
    %v1551 = vpop.f32.mrb[0].mxu0
    %v1552 = vadd.f32 0.0, %v1551
    %v1553 = vpop.f32.mrb[0].mxu0
    %v1554 = vadd.f32 0.0, %v1553
    %v1555 = vpop.f32.mrb[0].mxu0
    %v1556 = vpop.f32.mrb[0].mxu0
    %1557 = vdwg.mxu0
    %v1558 = vld [vmem:[%s6 + $0xa] sm:$0xf]
    %v1559 = vld [vmem:[%s6 + $0xe] sm:$0xf]
    %v1560 = vrot.slane %v1511, 4
    %v1561 = vadd.f32 %v1511, %v1560
    %v1562 = vrot.slane %v1561, 2
    %v1563 = vadd.f32 %v1561, %v1562
    %v1564 = vrot.slane %v1563, 1
    %v1565 = vadd.f32 %v1563, %v1564
    %v1566 = vrot.slane %v1513, 4
    %v1567 = vadd.f32 %v1513, %v1566
    %v1568 = vrot.slane %v1567, 2
    %v1569 = vadd.f32 %v1567, %v1568
    %v1570 = vrot.slane %v1569, 1
    %v1571 = vadd.f32 %v1569, %v1570
    %v1572 = vrot.slane %v1552, 4
    %v1573 = vadd.f32 %v1552, %v1572
    %v1574 = vrot.slane %v1573, 2
    %v1575 = vadd.f32 %v1573, %v1574
    %v1576 = vrot.slane %v1575, 1
    %v1577 = vadd.f32 %v1575, %v1576
    %v1578 = vrot.slane %v1554, 4
    %v1579 = vadd.f32 %v1554, %v1578
    %v1580 = vrot.slane %v1579, 2
    %v1581 = vadd.f32 %v1579, %v1580
    %v1582 = vrot.slane %v1581, 1
    %v1583 = vadd.f32 %v1581, %v1582
    %v1584 = vmul.f32 %v1565, %v599
    %v1585 = vmul.f32 %v1571, %v599
    %v1586 = vmul.f32 %v1577, %v599
    %v1587 = vmul.f32 %v1583, %v599
    %v1588 = vmul.f32 %v1511, %v1511
    %v1589 = vmul.f32 %v1513, %v1513
    %v1590 = vmul.f32 %v1552, %v1552
    %v1591 = vmul.f32 %v1554, %v1554
    %v1592 = vrot.slane %v1588, 4
    %v1593 = vadd.f32 %v1588, %v1592
    %v1594 = vrot.slane %v1593, 2
    %v1595 = vadd.f32 %v1593, %v1594
    %v1596 = vrot.slane %v1595, 1
    %v1597 = vadd.f32 %v1595, %v1596
    %v1598 = vrot.slane %v1589, 4
    %v1599 = vadd.f32 %v1589, %v1598
    %v1600 = vrot.slane %v1599, 2
    %v1601 = vadd.f32 %v1599, %v1600
    %v1602 = vrot.slane %v1601, 1
    %v1603 = vadd.f32 %v1601, %v1602
    %v1604 = vrot.slane %v1590, 4
    %v1605 = vadd.f32 %v1590, %v1604
    %v1606 = vrot.slane %v1605, 2
    %v1607 = vadd.f32 %v1605, %v1606
    %v1608 = vrot.slane %v1607, 1
    %v1609 = vadd.f32 %v1607, %v1608
    %v1610 = vrot.slane %v1591, 4
    %v1611 = vadd.f32 %v1591, %v1610
    %v1612 = vrot.slane %v1611, 2
    %v1613 = vadd.f32 %v1611, %v1612
    %v1614 = vrot.slane %v1613, 1
    %v1615 = vadd.f32 %v1613, %v1614
    %v1616 = vmul.f32 %v1597, %v599
    %v1617 = vmul.f32 %v1603, %v599
    %v1618 = vmul.f32 %v1609, %v599
    %v1619 = vmul.f32 %v1615, %v599
    %v1620 = vmul.f32 %v1584, %v1584
    %v1621 = vmul.f32 %v1585, %v1585
    %v1622 = vmul.f32 %v1586, %v1586
    %v1623 = vmul.f32 %v1587, %v1587
    %v1624 = vsub.f32 %v1616, %v1620
    %v1625 = vsub.f32 %v1617, %v1621
    %v1626 = vsub.f32 %v1618, %v1622
    %v1627 = vsub.f32 %v1619, %v1623
    %v1628 = vadd.f32 %v1624, 1e-05
    %v1629 = vadd.f32 %v1625, 1e-05
    %v1630 = vadd.f32 %v1626, 1e-05
    %v1631 = vadd.f32 %v1627, 1e-05
    %v1632 = vrsqrt.pop %v1628
    %v1633 = vrsqrt.pop %v1629
    %v1634 = vrsqrt.pop %v1630
    %v1635 = vrsqrt.pop %v1631
    %v1637 = vlaneseq
    %v1638 = vshrl.u32 %v1637, 7
    %v1639 = vsub.s32 0, %v1638
    %v1640 = vrot.slane %v1558, %v1639
    %v1641 = vlaneseq
    %v1642 = vshrl.u32 %v1641, 7
    %v1643 = vsub.s32 1, %v1642
    %v1644 = vrot.slane %v1558, %v1643
    %v1645 = vlaneseq
    %v1646 = vshrl.u32 %v1645, 7
    %v1647 = vsub.s32 2, %v1646
    %v1648 = vrot.slane %v1558, %v1647
    %v1649 = vlaneseq
    %v1650 = vshrl.u32 %v1649, 7
    %v1651 = vsub.s32 3, %v1650
    %v1652 = vrot.slane %v1558, %v1651
    %v1657 = vmul.f32 %v1632, %v1640
    %v1658 = vmul.f32 %v1633, %v1644
    %v1659 = vmul.f32 %v1634, %v1648
    %v1660 = vmul.f32 %v1635, %v1652
    %v1661 = vsub.f32 %v1511, %v1584
    %v1662 = vsub.f32 %v1513, %v1585
    %v1663 = vsub.f32 %v1552, %v1586
    %v1664 = vsub.f32 %v1554, %v1587
    %v1665 = vlaneseq
    %v1666 = vshrl.u32 %v1665, 7
    %v1667 = vsub.s32 0, %v1666
    %v1668 = vrot.slane %v1657, %v1667
    %v1669 = vlaneseq
    %v1670 = vshrl.u32 %v1669, 7
    %v1671 = vsub.s32 0, %v1670
    %v1672 = vrot.slane %v1658, %v1671
    %v1673 = vlaneseq
    %v1674 = vshrl.u32 %v1673, 7
    %v1675 = vsub.s32 0, %v1674
    %v1676 = vrot.slane %v1659, %v1675
    %v1677 = vlaneseq
    %v1678 = vshrl.u32 %v1677, 7
    %v1679 = vsub.s32 0, %v1678
    %v1680 = vrot.slane %v1660, %v1679
    %v1681 = vmul.f32 %v1661, %v1668
    %v1682 = vmul.f32 %v1662, %v1672
    %v1683 = vmul.f32 %v1663, %v1676
    %v1684 = vmul.f32 %v1664, %v1680
    %v1686 = vlaneseq
    %v1687 = vshrl.u32 %v1686, 7
    %v1688 = vsub.s32 0, %v1687
    %v1689 = vrot.slane %v1559, %v1688
    %v1690 = vlaneseq
    %v1691 = vshrl.u32 %v1690, 7
    %v1692 = vsub.s32 1, %v1691
    %v1693 = vrot.slane %v1559, %v1692
    %v1694 = vlaneseq
    %v1695 = vshrl.u32 %v1694, 7
    %v1696 = vsub.s32 2, %v1695
    %v1697 = vrot.slane %v1559, %v1696
    %v1698 = vlaneseq
    %v1699 = vshrl.u32 %v1698, 7
    %v1700 = vsub.s32 3, %v1699
    %v1701 = vrot.slane %v1559, %v1700
    %v1706 = vadd.f32 %v1681, %v1689
    %v1707 = vadd.f32 %v1682, %v1693
    %v1708 = vadd.f32 %v1683, %v1697
    %v1709 = vadd.f32 %v1684, %v1701
    %1710 = vst [vmem:[#allocation14] sm:$0xff] %v1706
    %1711 = vst [vmem:[#allocation14 + $0x8] sm:$0xff] %v1707
    %1712 = vst [vmem:[#allocation14 + $0x10] sm:$0xff] %v1708
    %1713 = vst [vmem:[#allocation14 + $0x18] sm:$0xff] %v1709
    %v1714 = vpack.c.bf16 %v1706, %v1706
    %v1715 = vpack.c.bf16 %v1707, %v1707
    %v1716 = vpack.c.bf16 %v1708, %v1708
    %v1717 = vpack.c.bf16 %v1709, %v1709
    %v1718 = vld [vmem:[#allocation11] sm:$0xf]
    %v1719 = vld [vmem:[#allocation11 + $0x4] sm:$0xf]
    %v1720 = vld [vmem:[#allocation11 + $0x8] sm:$0xf]
    %v1721 = vld [vmem:[#allocation11 + $0xc] sm:$0xf]
    %v1722 = vld [vmem:[#allocation11 + $0x10] sm:$0xf]
    %v1723 = vld [vmem:[#allocation11 + $0x14] sm:$0xf]
    %v1724 = vld [vmem:[#allocation11 + $0x18] sm:$0xf]
    %v1725 = vld [vmem:[#allocation11 + $0x1c] sm:$0xf]
    %v1726 = vld [vmem:[#allocation11 + $0x20] sm:$0xf]
    %v1727 = vld [vmem:[#allocation11 + $0x24] sm:$0xf]
    %v1728 = vld [vmem:[#allocation11 + $0x28] sm:$0xf]
    %v1729 = vld [vmem:[#allocation11 + $0x2c] sm:$0xf]
    %v1730 = vld [vmem:[#allocation11 + $0x30] sm:$0xf]
    %v1731 = vld [vmem:[#allocation11 + $0x34] sm:$0xf]
    %v1732 = vld [vmem:[#allocation11 + $0x38] sm:$0xf]
    %v1733 = vld [vmem:[#allocation11 + $0x3c] sm:$0xf]
    %v1734 = vld [vmem:[#allocation11 + $0x40] sm:$0xf]
    %v1735 = vld [vmem:[#allocation11 + $0x44] sm:$0xf]
    %v1736 = vld [vmem:[#allocation11 + $0x48] sm:$0xf]
    %v1737 = vld [vmem:[#allocation11 + $0x4c] sm:$0xf]
    %v1738 = vld [vmem:[#allocation11 + $0x50] sm:$0xf]
    %v1739 = vld [vmem:[#allocation11 + $0x54] sm:$0xf]
    %v1740 = vld [vmem:[#allocation11 + $0x58] sm:$0xf]
    %v1741 = vld [vmem:[#allocation11 + $0x5c] sm:$0xf]
    %v1742 = vld [vmem:[#allocation11 + $0x60] sm:$0xf]
    %v1743 = vld [vmem:[#allocation11 + $0x64] sm:$0xf]
    %v1744 = vld [vmem:[#allocation11 + $0x68] sm:$0xf]
    %v1745 = vld [vmem:[#allocation11 + $0x6c] sm:$0xf]
    %v1746 = vld [vmem:[#allocation11 + $0x70] sm:$0xf]
    %v1747 = vld [vmem:[#allocation11 + $0x74] sm:$0xf]
    %v1748 = vld [vmem:[#allocation11 + $0x78] sm:$0xf]
    %v1749 = vld [vmem:[#allocation11 + $0x7c] sm:$0xf]
    %v1750 = vld [vmem:[#allocation11 + $0x80] sm:$0xf]
    %v1751 = vld [vmem:[#allocation11 + $0x84] sm:$0xf]
    %v1752 = vld [vmem:[#allocation11 + $0x88] sm:$0xf]
    %v1753 = vld [vmem:[#allocation11 + $0x8c] sm:$0xf]
    %v1754 = vld [vmem:[#allocation11 + $0x90] sm:$0xf]
    %v1755 = vld [vmem:[#allocation11 + $0x94] sm:$0xf]
    %v1756 = vld [vmem:[#allocation11 + $0x98] sm:$0xf]
    %v1757 = vld [vmem:[#allocation11 + $0x9c] sm:$0xf]
    %v1758 = vld [vmem:[#allocation11 + $0xa0] sm:$0xf]
    %v1759 = vld [vmem:[#allocation11 + $0xa4] sm:$0xf]
    %v1760 = vld [vmem:[#allocation11 + $0xa8] sm:$0xf]
    %v1761 = vld [vmem:[#allocation11 + $0xac] sm:$0xf]
    %v1762 = vld [vmem:[#allocation11 + $0xb0] sm:$0xf]
    %v1763 = vld [vmem:[#allocation11 + $0xb4] sm:$0xf]
    %v1764 = vld [vmem:[#allocation11 + $0xb8] sm:$0xf]
    %v1765 = vld [vmem:[#allocation11 + $0xbc] sm:$0xf]
    %v1766 = vld [vmem:[#allocation11 + $0xc0] sm:$0xf]
    %v1767 = vld [vmem:[#allocation11 + $0xc4] sm:$0xf]
    %v1768 = vld [vmem:[#allocation11 + $0xc8] sm:$0xf]
    %v1769 = vld [vmem:[#allocation11 + $0xcc] sm:$0xf]
    %v1770 = vld [vmem:[#allocation11 + $0xd0] sm:$0xf]
    %v1771 = vld [vmem:[#allocation11 + $0xd4] sm:$0xf]
    %v1772 = vld [vmem:[#allocation11 + $0xd8] sm:$0xf]
    %v1773 = vld [vmem:[#allocation11 + $0xdc] sm:$0xf]
    %v1774 = vld [vmem:[#allocation11 + $0xe0] sm:$0xf]
    %v1775 = vld [vmem:[#allocation11 + $0xe4] sm:$0xf]
    %v1776 = vld [vmem:[#allocation11 + $0xe8] sm:$0xf]
    %v1777 = vld [vmem:[#allocation11 + $0xec] sm:$0xf]
    %v1778 = vld [vmem:[#allocation11 + $0xf0] sm:$0xf]
    %v1779 = vld [vmem:[#allocation11 + $0xf4] sm:$0xf]
    %v1780 = vld [vmem:[#allocation11 + $0xf8] sm:$0xf]
    %v1781 = vld [vmem:[#allocation11 + $0xfc] sm:$0xf]
    %v1782 = vld [vmem:[%s6 + $0x12] sm:$0x1]
    %v1784 = vlaneseq
    %v1785 = vshrl.u32 %v1784, 7
    %v1786 = vsub.s32 0, %v1785
    %v1787 = vrot.slane %v1782, %v1786
    %v1853 = vunpack.c.l.b16 %v1718
    %v1854 = vunpack.c.l.b16 %v1719
    %v1855 = vunpack.c.l.b16 %v1720
    %v1856 = vunpack.c.l.b16 %v1721
    %v1857 = vunpack.c.l.b16 %v1722
    %v1858 = vunpack.c.l.b16 %v1723
    %v1859 = vunpack.c.l.b16 %v1724
    %v1860 = vunpack.c.l.b16 %v1725
    %v1861 = vunpack.c.l.b16 %v1726
    %v1862 = vunpack.c.l.b16 %v1727
    %v1863 = vunpack.c.l.b16 %v1728
    %v1864 = vunpack.c.l.b16 %v1729
    %v1865 = vunpack.c.l.b16 %v1730
    %v1866 = vunpack.c.l.b16 %v1731
    %v1867 = vunpack.c.l.b16 %v1732
    %v1868 = vunpack.c.l.b16 %v1733
    %v1869 = vunpack.c.l.b16 %v1734
    %v1870 = vunpack.c.l.b16 %v1735
    %v1871 = vunpack.c.l.b16 %v1736
    %v1872 = vunpack.c.l.b16 %v1737
    %v1873 = vunpack.c.l.b16 %v1738
    %v1874 = vunpack.c.l.b16 %v1739
    %v1875 = vunpack.c.l.b16 %v1740
    %v1876 = vunpack.c.l.b16 %v1741
    %v1877 = vunpack.c.l.b16 %v1742
    %v1878 = vunpack.c.l.b16 %v1743
    %v1879 = vunpack.c.l.b16 %v1744
    %v1880 = vunpack.c.l.b16 %v1745
    %v1881 = vunpack.c.l.b16 %v1746
    %v1882 = vunpack.c.l.b16 %v1747
    %v1883 = vunpack.c.l.b16 %v1748
    %v1884 = vunpack.c.l.b16 %v1749
    %v1885 = vunpack.c.l.b16 %v1750
    %v1886 = vunpack.c.l.b16 %v1751
    %v1887 = vunpack.c.l.b16 %v1752
    %v1888 = vunpack.c.l.b16 %v1753
    %v1889 = vunpack.c.l.b16 %v1754
    %v1890 = vunpack.c.l.b16 %v1755
    %v1891 = vunpack.c.l.b16 %v1756
    %v1892 = vunpack.c.l.b16 %v1757
    %v1893 = vunpack.c.l.b16 %v1758
    %v1894 = vunpack.c.l.b16 %v1759
    %v1895 = vunpack.c.l.b16 %v1760
    %v1896 = vunpack.c.l.b16 %v1761
    %v1897 = vunpack.c.l.b16 %v1762
    %v1898 = vunpack.c.l.b16 %v1763
    %v1899 = vunpack.c.l.b16 %v1764
    %v1900 = vunpack.c.l.b16 %v1765
    %v1901 = vunpack.c.l.b16 %v1766
    %v1902 = vunpack.c.l.b16 %v1767
    %v1903 = vunpack.c.l.b16 %v1768
    %v1904 = vunpack.c.l.b16 %v1769
    %v1905 = vunpack.c.l.b16 %v1770
    %v1906 = vunpack.c.l.b16 %v1771
    %v1907 = vunpack.c.l.b16 %v1772
    %v1908 = vunpack.c.l.b16 %v1773
    %v1909 = vunpack.c.l.b16 %v1774
    %v1910 = vunpack.c.l.b16 %v1775
    %v1911 = vunpack.c.l.b16 %v1776
    %v1912 = vunpack.c.l.b16 %v1777
    %v1913 = vunpack.c.l.b16 %v1778
    %v1914 = vunpack.c.l.b16 %v1779
    %v1915 = vunpack.c.l.b16 %v1780
    %v1916 = vunpack.c.l.b16 %v1781
    %v1917 = vpack.c.b16 %v1854, %v1853
    %v1918 = vpack.c.b16 %v1856, %v1855
    %v1919 = vpack.c.b16 %v1858, %v1857
    %v1920 = vpack.c.b16 %v1860, %v1859
    %v1921 = vpack.c.b16 %v1862, %v1861
    %v1922 = vpack.c.b16 %v1864, %v1863
    %v1923 = vpack.c.b16 %v1866, %v1865
    %v1924 = vpack.c.b16 %v1868, %v1867
    %v1925 = vpack.c.b16 %v1870, %v1869
    %v1926 = vpack.c.b16 %v1872, %v1871
    %v1927 = vpack.c.b16 %v1874, %v1873
    %v1928 = vpack.c.b16 %v1876, %v1875
    %v1929 = vpack.c.b16 %v1878, %v1877
    %v1930 = vpack.c.b16 %v1880, %v1879
    %v1931 = vpack.c.b16 %v1882, %v1881
    %v1932 = vpack.c.b16 %v1884, %v1883
    %v1933 = vpack.c.b16 %v1886, %v1885
    %v1934 = vpack.c.b16 %v1888, %v1887
    %v1935 = vpack.c.b16 %v1890, %v1889
    %v1936 = vpack.c.b16 %v1892, %v1891
    %v1937 = vpack.c.b16 %v1894, %v1893
    %v1938 = vpack.c.b16 %v1896, %v1895
    %v1939 = vpack.c.b16 %v1898, %v1897
    %v1940 = vpack.c.b16 %v1900, %v1899
    %v1941 = vpack.c.b16 %v1902, %v1901
    %v1942 = vpack.c.b16 %v1904, %v1903
    %v1943 = vpack.c.b16 %v1906, %v1905
    %v1944 = vpack.c.b16 %v1908, %v1907
    %v1945 = vpack.c.b16 %v1910, %v1909
    %v1946 = vpack.c.b16 %v1912, %v1911
    %v1947 = vpack.c.b16 %v1914, %v1913
    %v1948 = vpack.c.b16 %v1916, %v1915
    %1981 = vmatprep.subr.bf16.mxu0 0
    %1982 = vmatpush1.bf16.msra.mxu0 %v1917
    %1983 = vmatprep.subr.bf16.mxu0 0
    %1984 = vmatpush1.bf16.msra.mxu0 %v1918
    %1985 = vmatprep.subr.bf16.mxu0 0
    %1986 = vmatpush1.bf16.msra.mxu0 %v1919
    %1987 = vmatprep.subr.bf16.mxu0 0
    %1988 = vmatpush1.bf16.msra.mxu0 %v1920
    %1989 = vmatprep.subr.bf16.mxu0 0
    %1990 = vmatpush1.bf16.msra.mxu0 %v1921
    %1991 = vmatprep.subr.bf16.mxu0 0
    %1992 = vmatpush1.bf16.msra.mxu0 %v1922
    %1993 = vmatprep.subr.bf16.mxu0 0
    %1994 = vmatpush1.bf16.msra.mxu0 %v1923
    %1995 = vmatprep.subr.bf16.mxu0 0
    %1996 = vmatpush1.bf16.msra.mxu0 %v1924
    %1997 = vmatprep.subr.bf16.mxu0 0
    %1998 = vmatpush1.bf16.msra.mxu0 %v1925
    %1999 = vmatprep.subr.bf16.mxu0 0
    %2000 = vmatpush1.bf16.msra.mxu0 %v1926
    %2001 = vmatprep.subr.bf16.mxu0 0
    %2002 = vmatpush1.bf16.msra.mxu0 %v1927
    %2003 = vmatprep.subr.bf16.mxu0 0
    %2004 = vmatpush1.bf16.msra.mxu0 %v1928
    %2005 = vmatprep.subr.bf16.mxu0 0
    %2006 = vmatpush1.bf16.msra.mxu0 %v1929
    %2007 = vmatprep.subr.bf16.mxu0 0
    %2008 = vmatpush1.bf16.msra.mxu0 %v1930
    %2009 = vmatprep.subr.bf16.mxu0 0
    %2010 = vmatpush1.bf16.msra.mxu0 %v1931
    %2011 = vmatprep.subr.bf16.mxu0 0
    %2012 = vmatpush1.bf16.msra.mxu0 %v1932
    %2013 = vmatprep.mubr.bf16.mxu0 %v1715
    %2014 = vmatmul.mubr.bf16.gmra.mrb[0].mxu0 %v1714
    %v2015 = vpop.f32.mrb[0].mxu0
    %v2016 = vadd.f32 %v1787, %v2015
    %v2017 = vpop.f32.mrb[0].mxu0
    %v2018 = vpop.f32.mrb[0].mxu0
    %v2019 = vpop.f32.mrb[0].mxu0
    %2020 = vdwg.mxu0
    %2021 = vmatprep.subr.bf16.mxu0 0
    %2022 = vmatpush1.bf16.msra.mxu0 %v1933
    %2023 = vmatprep.subr.bf16.mxu0 0
    %2024 = vmatpush1.bf16.msra.mxu0 %v1934
    %2025 = vmatprep.subr.bf16.mxu0 0
    %2026 = vmatpush1.bf16.msra.mxu0 %v1935
    %2027 = vmatprep.subr.bf16.mxu0 0
    %2028 = vmatpush1.bf16.msra.mxu0 %v1936
    %2029 = vmatprep.subr.bf16.mxu0 0
    %2030 = vmatpush1.bf16.msra.mxu0 %v1937
    %2031 = vmatprep.subr.bf16.mxu0 0
    %2032 = vmatpush1.bf16.msra.mxu0 %v1938
    %2033 = vmatprep.subr.bf16.mxu0 0
    %2034 = vmatpush1.bf16.msra.mxu0 %v1939
    %2035 = vmatprep.subr.bf16.mxu0 0
    %2036 = vmatpush1.bf16.msra.mxu0 %v1940
    %2037 = vmatprep.subr.bf16.mxu0 0
    %2038 = vmatpush1.bf16.msra.mxu0 %v1941
    %2039 = vmatprep.subr.bf16.mxu0 0
    %2040 = vmatpush1.bf16.msra.mxu0 %v1942
    %2041 = vmatprep.subr.bf16.mxu0 0
    %2042 = vmatpush1.bf16.msra.mxu0 %v1943
    %2043 = vmatprep.subr.bf16.mxu0 0
    %2044 = vmatpush1.bf16.msra.mxu0 %v1944
    %2045 = vmatprep.subr.bf16.mxu0 0
    %2046 = vmatpush1.bf16.msra.mxu0 %v1945
    %2047 = vmatprep.subr.bf16.mxu0 0
    %2048 = vmatpush1.bf16.msra.mxu0 %v1946
    %2049 = vmatprep.subr.bf16.mxu0 0
    %2050 = vmatpush1.bf16.msra.mxu0 %v1947
    %2051 = vmatprep.subr.bf16.mxu0 0
    %2052 = vmatpush1.bf16.msra.mxu0 %v1948
    %2053 = vmatprep.mubr.bf16.mxu0 %v1717
    %2054 = vmatmul.mubr.bf16.gmra.mrb[0].mxu0 %v1716
    %v2055 = vpop.f32.mrb[0].mxu0
    %v2056 = vadd.f32 %v2016, %v2055
    %v2057 = vpop.f32.mrb[0].mxu0
    %v2058 = vpop.f32.mrb[0].mxu0
    %v2059 = vpop.f32.mrb[0].mxu0
    %2060 = vdwg.mxu0
    %2061 = vst [vmem:[#allocation13] sm:$0xff] %v2056
    // Predicated region
    $region54: #{tpu_custom_call.1} parent=1 // pred_check
      _
    $region55: #{tpu_custom_call.1} parent=1 // pred_check_branch
      %2063 = sbr.rel (0) target = $region57
    $region56: #{tpu_custom_call.1} parent=1 // pred_region
      %s2065 = ssub.s32 128, 128
      %2066 = vsyncadd [#allocation4], %s2065
      %s2068 = sshll.u32 [#allocation13], 4
      %s2069 = int_to_ptr.vmem [resolvable:$true] %s2068
      %2071 = dma.vmem_to_hbm [thread:$0]  %s2069, 128, %s7, [#allocation4]
    $region57: #{tpu_custom_call.1} parent=1 // pred_fallthru
      _
    // Predicated region
    $region58: #{tpu_custom_call.1} parent=1 // pred_check
      _
    $region59: #{tpu_custom_call.1} parent=1 // pred_check_branch
      %2073 = sbr.rel (0) target = $region61
    $region60: #{tpu_custom_call.1} parent=1 // pred_region
      %s2075 = ssub.s32 512, 512
      %2076 = vsyncadd [#allocation15], %s2075
      %s2078 = sshll.u32 [#allocation14], 4
      %s2079 = int_to_ptr.vmem [resolvable:$true] %s2078
      %2081 = dma.vmem_to_hbm [thread:$0]  %s2079, 512, %s8, [#allocation15]
    $region61: #{tpu_custom_call.1} parent=1 // pred_fallthru
      _
    // Predicated region
    $region62: #{tpu_custom_call.1} parent=1 // pred_check
      _
    $region63: #{tpu_custom_call.1} parent=1 // pred_check_branch
      %2083 = sbr.rel (0) target = $region65
    $region64: #{tpu_custom_call.1} parent=1 // pred_region
      %2084 = dma.done [#allocation4], 128
    $region65: #{tpu_custom_call.1} parent=1 // pred_fallthru
      _
    // Predicated region
    $region66: #{tpu_custom_call.1} parent=1 // pred_check
      _
    $region67: #{tpu_custom_call.1} parent=1 // pred_check_branch
      %2086 = sbr.rel (0) target = $region69
    $region68: #{tpu_custom_call.1} parent=1 // pred_region
      %2087 = dma.done [#allocation15], 512
    $region69: #{tpu_custom_call.1} parent=1 // pred_fallthru
      _
    %2088 = vsyncpa [#allocation3], 1
    %2089 = vsyncpa [#allocation6], 1
    %2090 = vsyncpa [#allocation9], 1
    %2091 = vsyncpa [#allocation12], 1
    %2092 = vsyncpa [#allocation4], 1
    %2093 = vsyncpa [#allocation15], 1

</llo_original>
